<compile_context>
chip_gen: v7x
topology: tpu7x:2x2x1
jax: 0.10.0
libtpu: 0.0.40
codegen_flags: <defaults>
</compile_context>

<pallas_src>
import math

import jax
import jax.numpy as jnp
from jax.experimental import pallas as pl
from jax.experimental.pallas import tpu as pltpu

# ---------------- small synthetic BERT config (no checkpoint loading) --------
VOCAB = 64
MAX_POS = 16
TYPE_VOCAB = 2
HIDDEN = 32
INTER = 128            # 4 * HIDDEN, BERT convention (also the lane-pad width)
NUM_LAYERS = 2
NUM_HEADS = 2
HEAD_DIM = HIDDEN // NUM_HEADS
NUM_LOC = 4            # location_classifier out features
NUM_OBJ = 2            # object_classifier out features
HEAD_PAD = 128         # lane-dense width of the fused classifier-head output slab
LN_EPS = 1e-12         # BERT LayerNorm eps
MASK_NEG = -1e9


# ---------------- shared math helpers (used in-kernel and in the reference) --
def _layernorm(x, g, b, eps):
    mu = jnp.mean(x, axis=-1, keepdims=True)
    var = jnp.mean((x - mu) ** 2, axis=-1, keepdims=True)
    return (x - mu) * jax.lax.rsqrt(var + eps) * g + b


def _gelu(x):
    # TODO(synk): HF BERT default is exact erf-GELU; tanh approximation used for robust
    # Mosaic lowering (tiny logits drift vs the PyTorch reference, within test tolerance).
    c = math.sqrt(2.0 / math.pi)
    return 0.5 * x * (1.0 + jnp.tanh(c * (x + 0.044715 * x * x * x)))


# ---------------- fused forward kernel ----------------------------------------
def _build_fused_kernel(batch, seq):
    bs = batch * seq

    def kernel(emb_ref, embln_ref, mask_ref,
               w_attn_ref, w_ff1_ref, w_ff2_ref, vec_ref,
               wh_ref, bh_ref,
               out_ref,
               acts_ref):
        layer = pl.program_id(0)

        # -- grid step 0: embedding LayerNorm straight into the resident activation scratch.
        @pl.when(layer == 0)
        def _():
            eln = embln_ref[...]                        # [2, H]: row 0 gamma, row 1 beta
            acts_ref[...] = _layernorm(emb_ref[...], eln[0:1, :], eln[1:2, :], LN_EPS)

        x = acts_ref[...]                               # [B*S, H] resident activations (f32)
        w_attn = w_attn_ref[0]                          # [H, 4H]: cols [0:3H]=Wq|Wk|Wv, [3H:]=Wo
        vec = vec_ref[0]                                # [8, 128] packed biases / LN params

        # -- fused QKV projection: one MXU matmul instead of three.
        #    (softmax scale 1/sqrt(head_dim) is pre-folded into Wq / bq at pack time)
        qkv = (jnp.dot(x, w_attn[:, :3 * HIDDEN], preferred_element_type=jnp.float32)
               + vec[0:1, :3 * HIDDEN])                 # [B*S, 3H]
        qkv3 = qkv.reshape(batch, seq, 3 * HIDDEN)

        # -- attention (mask broadcast hoisted out of the head loop).
        mask_b = jnp.broadcast_to(mask_ref[...], (batch, seq, seq))
        wo = w_attn[:, 3 * HIDDEN:]                     # [H, H]

        # Output projection decomposed per head: attn = sum_h ctx_h @ Wo[h*HD:(h+1)*HD, :]
        # -> no context tensor assembled, no lane-masked partial stores / concatenates.
        attn = jnp.zeros((bs, HIDDEN), jnp.float32)
        for head in range(NUM_HEADS):                   # static unroll (NUM_HEADS == 2)
            o = head * HEAD_DIM
            qh = qkv3[:, :, o:o + HEAD_DIM]
            kh = qkv3[:, :, HIDDEN + o:HIDDEN + o + HEAD_DIM]
            vh = qkv3[:, :, 2 * HIDDEN + o:2 * HIDDEN + o + HEAD_DIM]
            s = (jnp.einsum('bqd,bkd->bqk', qh, kh,
                            preferred_element_type=jnp.float32) + mask_b)
            m = jnp.max(s, axis=-1, keepdims=True)
            e = jnp.exp(s - m)
            p = e * pl.reciprocal(jnp.sum(e, axis=-1, keepdims=True), approx=True)
            ctx_h = jnp.einsum('bqk,bkd->bqd', p, vh, preferred_element_type=jnp.float32)
            attn = attn + jnp.dot(ctx_h.reshape(bs, HEAD_DIM), wo[o:o + HEAD_DIM, :],
                                  preferred_element_type=jnp.float32)

        attn_out = attn + vec[1:2, :HIDDEN]
        h1 = _layernorm(x + attn_out, vec[4:5, :HIDDEN], vec[5:6, :HIDDEN], LN_EPS)

        # -- feed-forward.
        ff = _gelu(jnp.dot(h1, w_ff1_ref[0], preferred_element_type=jnp.float32)
                   + vec[2:3, :INTER])
        ff2 = (jnp.dot(ff, w_ff2_ref[0], preferred_element_type=jnp.float32)
               + vec[3:4, :HIDDEN])
        h2 = _layernorm(h1 + ff2, vec[6:7, :HIDDEN], vec[7:8, :HIDDEN], LN_EPS)
        acts_ref[...] = h2

        # -- last step: classifier heads fused in; one lane-dense [B*S, 128] output slab
        #    (loc logits in cols [:4], obj logits in [4:6]; CLS rows selected in JAX glue).
        @pl.when(layer == NUM_LAYERS - 1)
        def _():
            out_ref[...] = (jnp.dot(h2, wh_ref[...], preferred_element_type=jnp.float32)
                            + bh_ref[...])

    return kernel


# ---------------- wrapper: one pallas_call for the whole forward --------------
def multitask_forward(packed, input_ids, attention_mask):
    batch, seq = input_ids.shape

    # Embedding gathers are data-dependent lookups -> JAX glue; everything else is one kernel.
    positions = jnp.arange(seq)
    token_type = jnp.zeros((batch, seq), jnp.int32)
    emb = (packed["word_emb"][input_ids]
           + packed["pos_emb"][positions][None, :, :]
           + packed["type_emb"][token_type]).astype(jnp.float32)
    emb_flat = emb.reshape(batch * seq, HIDDEN)
    add_mask = ((1.0 - attention_mask.astype(jnp.float32)) * MASK_NEG).reshape(batch, 1, seq)

    const2 = lambda l: (0, 0)
    const3 = lambda l: (0, 0, 0)
    per_layer = lambda l: (l, 0, 0)

    slab = pl.pallas_call(
        _build_fused_kernel(batch, seq),
        out_shape=jax.ShapeDtypeStruct((batch * seq, HEAD_PAD), jnp.float32),
        grid=(NUM_LAYERS,),
        in_specs=[
            pl.BlockSpec((batch * seq, HIDDEN), const2),       # embeddings (pre-LN)
            pl.BlockSpec((2, HIDDEN), const2),                 # embedding LN gamma/beta
            pl.BlockSpec((batch, 1, seq), const3),             # additive attention mask
            pl.BlockSpec((1, HIDDEN, 4 * HIDDEN), per_layer),  # per-layer Wq|Wk|Wv|Wo
            pl.BlockSpec((1, HIDDEN, INTER), per_layer),       # per-layer FFN W1
            pl.BlockSpec((1, INTER, HIDDEN), per_layer),       # per-layer FFN W2
            pl.BlockSpec((1, 8, INTER), per_layer),            # per-layer biases + LN slab
            pl.BlockSpec((HIDDEN, HEAD_PAD), const2),          # classifier weights (lane-padded)
            pl.BlockSpec((1, HEAD_PAD), const2),               # classifier bias (lane-padded)
        ],
        out_specs=pl.BlockSpec((batch * seq, HEAD_PAD), const2),
        scratch_shapes=[pltpu.VMEM((batch * seq, HIDDEN), jnp.float32)],  # resident activations
        compiler_params=pltpu.CompilerParams(dimension_semantics=("arbitrary",)),
    )(emb_flat, packed["emb_ln"], add_mask,
      packed["w_attn"], packed["w_ff1"], packed["w_ff2"], packed["vec"],
      packed["w_heads"], packed["b_heads"])

    cls_slab = slab.reshape(batch, seq, HEAD_PAD)[:, 0, :]     # CLS rows ([:, 0, :])
    return cls_slab[:, :NUM_LOC], cls_slab[:, NUM_LOC:NUM_LOC + NUM_OBJ]


# ---------------- deterministic parameter init (natural, PyTorch-like) -------
def init_params(key):
    keys = iter(jax.random.split(key, 64))

    def nrm(shape):
        return (0.02 * jax.random.normal(next(keys), shape)).astype(jnp.float32)

    zeros = lambda shape: jnp.zeros(shape, jnp.float32)
    ones = lambda shape: jnp.ones(shape, jnp.float32)

    params = {
        "word_emb": nrm((VOCAB, HIDDEN)),
        "pos_emb": nrm((MAX_POS, HIDDEN)),
        "type_emb": nrm((TYPE_VOCAB, HIDDEN)),
        "emb_ln_g": ones((1, HIDDEN)),
        "emb_ln_b": zeros((1, HIDDEN)),
        "layers": [],
        "loc_w": nrm((HIDDEN, NUM_LOC)),
        "loc_b": zeros((1, NUM_LOC)),
        "obj_w": nrm((HIDDEN, NUM_OBJ)),
        "obj_b": zeros((1, NUM_OBJ)),
    }
    for _ in range(NUM_LAYERS):
        params["layers"].append({
            "wq": nrm((HIDDEN, HIDDEN)), "bq": zeros((1, HIDDEN)),
            "wk": nrm((HIDDEN, HIDDEN)), "bk": zeros((1, HIDDEN)),
            "wv": nrm((HIDDEN, HIDDEN)), "bv": zeros((1, HIDDEN)),
            "wo": nrm((HIDDEN, HIDDEN)), "bo": zeros((1, HIDDEN)),
            "ln1_g": ones((1, HIDDEN)), "ln1_b": zeros((1, HIDDEN)),
            "w1": nrm((HIDDEN, INTER)), "b1": zeros((1, INTER)),
            "w2": nrm((INTER, HIDDEN)), "b2": zeros((1, HIDDEN)),
            "ln2_g": ones((1, HIDDEN)), "ln2_b": zeros((1, HIDDEN)),
        })
    return params


# ---------------- packing: few stacked, lane-dense arrays for the kernel -----
def _pad_lane(v, width=INTER):
    v = v.reshape(-1)
    return jnp.pad(v, (0, width - v.shape[0]))


def pack_params(params):
    scale = 1.0 / math.sqrt(HEAD_DIM)      # softmax scale folded into Wq / bq
    w_attn, w_ff1, w_ff2, vec = [], [], [], []
    for lyr in params["layers"]:
        w_attn.append(jnp.concatenate(
            [lyr["wq"] * scale, lyr["wk"], lyr["wv"], lyr["wo"]], axis=1))
        w_ff1.append(lyr["w1"])
        w_ff2.append(lyr["w2"])
        bqkv = jnp.concatenate([lyr["bq"] * scale, lyr["bk"], lyr["bv"]], axis=1)
        vec.append(jnp.stack([
            _pad_lane(bqkv), _pad_lane(lyr["bo"]), _pad_lane(lyr["b1"]), _pad_lane(lyr["b2"]),
            _pad_lane(lyr["ln1_g"]), _pad_lane(lyr["ln1_b"]),
            _pad_lane(lyr["ln2_g"]), _pad_lane(lyr["ln2_b"]),
        ]))
    head_pad = HEAD_PAD - NUM_LOC - NUM_OBJ
    w_heads = jnp.concatenate(
        [params["loc_w"], params["obj_w"], jnp.zeros((HIDDEN, head_pad), jnp.float32)], axis=1)
    b_heads = jnp.concatenate(
        [params["loc_b"], params["obj_b"], jnp.zeros((1, head_pad), jnp.float32)], axis=1)
    return {
        "word_emb": params["word_emb"],
        "pos_emb": params["pos_emb"],
        "type_emb": params["type_emb"],
        "emb_ln": jnp.concatenate([params["emb_ln_g"], params["emb_ln_b"]], axis=0),  # [2, H]
        "w_attn": jnp.stack(w_attn),   # [L, H, 4H]   (Wq*c | Wk | Wv | Wo)
        "w_ff1": jnp.stack(w_ff1),     # [L, H, INTER]
        "w_ff2": jnp.stack(w_ff2),     # [L, INTER, H]
        "vec": jnp.stack(vec),         # [L, 8, 128]  (bqkv, bo, b1, b2, ln1_g/b, ln2_g/b)
        "w_heads": w_heads,            # [H, 128]     (loc | obj | zero pad)
        "b_heads": b_heads,            # [1, 128]
    }


# ---------------- pure-JAX reference (same math, unfused) ---------------------
def reference_forward(params, input_ids, attention_mask):
    hp = jax.lax.Precision.HIGHEST
    batch, seq = input_ids.shape
    positions = jnp.arange(seq)
    token_type = jnp.zeros((batch, seq), jnp.int32)
    emb = (params["word_emb"][input_ids]
           + params["pos_emb"][positions][None, :, :]
           + params["type_emb"][token_type]).astype(jnp.float32)
    h = _layernorm(emb, params["emb_ln_g"], params["emb_ln_b"], LN_EPS)

    add_mask = ((1.0 - attention_mask.astype(jnp.float32)) * MASK_NEG)[:, None, None, :]
    for lyr in params["layers"]:
        q = jnp.einsum('bsh,hk->bsk', h, lyr["wq"], precision=hp) + lyr["bq"]
        k = jnp.einsum('bsh,hk->bsk', h, lyr["wk"], precision=hp) + lyr["bk"]
        v = jnp.einsum('bsh,hk->bsk', h, lyr["wv"], precision=hp) + lyr["bv"]
        qh = q.reshape(batch, seq, NUM_HEADS, HEAD_DIM)
        kh = k.reshape(batch, seq, NUM_HEADS, HEAD_DIM)
        vh = v.reshape(batch, seq, NUM_HEADS, HEAD_DIM)
        s = (jnp.einsum('bqnd,bknd->bnqk', qh, kh, precision=hp) / math.sqrt(HEAD_DIM)
             + add_mask)
        p = jax.nn.softmax(s, axis=-1)
        ctx = jnp.einsum('bnqk,bknd->bqnd', p, vh, precision=hp).reshape(batch, seq, HIDDEN)
        attn = jnp.einsum('bsh,hk->bsk', ctx, lyr["wo"], precision=hp) + lyr["bo"]
        h1 = _layernorm(h + attn, lyr["ln1_g"], lyr["ln1_b"], LN_EPS)
        ff = _gelu(jnp.einsum('bsh,hk->bsk', h1, lyr["w1"], precision=hp) + lyr["b1"])
        ff2 = jnp.einsum('bsh,hk->bsk', ff, lyr["w2"], precision=hp) + lyr["b2"]
        h = _layernorm(h1 + ff2, lyr["ln2_g"], lyr["ln2_b"], LN_EPS)

    cls = h[:, 0, :]
    loc = jnp.dot(cls, params["loc_w"], precision=hp) + params["loc_b"]
    obj = jnp.dot(cls, params["obj_w"], precision=hp) + params["obj_b"]
    return loc, obj


if __name__ == "__main__":
    key = jax.random.PRNGKey(0)
    pkey, ikey = jax.random.split(key)
    params = init_params(pkey)
    packed = pack_params(params)

    batch, seq = 2, 8
    input_ids = jax.random.randint(ikey, (batch, seq), 0, VOCAB, dtype=jnp.int32)
    attention_mask = jnp.array([[1, 1, 1, 1, 1, 1, 1, 1],
                                [1, 1, 1, 1, 1, 1, 0, 0]], dtype=jnp.int32)

    loc_logits, obj_logits = jax.jit(multitask_forward)(packed, input_ids, attention_mask)
    jax.block_until_ready((loc_logits, obj_logits))

    assert loc_logits.shape == (batch, NUM_LOC)
    assert obj_logits.shape == (batch, NUM_OBJ)
    assert bool(jnp.all(jnp.isfinite(loc_logits)))
    assert bool(jnp.all(jnp.isfinite(obj_logits)))

    # numeric check against the pure-JAX reference of the same math
    ref_loc, ref_obj = reference_forward(params, input_ids, attention_mask)
    assert bool(jnp.allclose(loc_logits, ref_loc, rtol=5e-2, atol=5e-3))
    assert bool(jnp.allclose(obj_logits, ref_obj, rtol=5e-2, atol=5e-3))

    print("KERNEL_OK")
</pallas_src>

<mosaic_0001>
module attributes {stable_mosaic.version = 11 : i64} {
  func.func @kernel(%arg0: i32, %arg1: memref<16x32xf32, #tpu.memory_space<vmem>>, %arg2: memref<2x32xf32, #tpu.memory_space<vmem>>, %arg3: memref<2x1x8xf32, #tpu.memory_space<vmem>>, %arg4: memref<1x32x128xf32, #tpu.memory_space<vmem>>, %arg5: memref<1x32x128xf32, #tpu.memory_space<vmem>>, %arg6: memref<1x128x32xf32, #tpu.memory_space<vmem>>, %arg7: memref<1x8x128xf32, #tpu.memory_space<vmem>>, %arg8: memref<32x128xf32, #tpu.memory_space<vmem>>, %arg9: memref<1x128xf32, #tpu.memory_space<vmem>>, %arg10: memref<16x128xf32, #tpu.memory_space<vmem>>, %arg11: memref<16x32xf32, #tpu.memory_space<vmem>>) attributes {dimension_semantics = [#tpu.dimension_semantics<arbitrary>], iteration_bounds = array<i64: 2>, scalar_prefetch = 0 : i64, scratch_operands = 1 : i64, tpu.core_type = #tpu.core_type<tc>, window_params = [{pipeline_mode = #tpu.pipeline_mode<synchronous>, transform_indices = @transform_0, window_bounds = array<i64: 16, 32>}, {pipeline_mode = #tpu.pipeline_mode<synchronous>, transform_indices = @transform_1, window_bounds = array<i64: 2, 32>}, {pipeline_mode = #tpu.pipeline_mode<synchronous>, transform_indices = @transform_2, window_bounds = array<i64: 2, 1, 8>}, {transform_indices = @transform_3, window_bounds = array<i64: 1, 32, 128>}, {transform_indices = @transform_4, window_bounds = array<i64: 1, 32, 128>}, {transform_indices = @transform_5, window_bounds = array<i64: 1, 128, 32>}, {transform_indices = @transform_6, window_bounds = array<i64: 1, 8, 128>}, {pipeline_mode = #tpu.pipeline_mode<synchronous>, transform_indices = @transform_7, window_bounds = array<i64: 32, 128>}, {pipeline_mode = #tpu.pipeline_mode<synchronous>, transform_indices = @transform_8, window_bounds = array<i64: 1, 128>}, {pipeline_mode = #tpu.pipeline_mode<synchronous>, transform_indices = @transform_9, window_bounds = array<i64: 16, 128>}]} {
    %c0_i32 = arith.constant 0 : i32
    %0 = arith.cmpi eq, %arg0, %c0_i32 : i32
    %1 = arith.extui %0 : i1 to i32
    %c0_i32_0 = arith.constant 0 : i32
    %2 = arith.cmpi ne, %1, %c0_i32_0 : i32
    scf.if %2 {
      %c0_47 = arith.constant 0 : index
      %c0_48 = arith.constant 0 : index
      %141 = vector.load %arg2[%c0_47, %c0_48] : memref<2x32xf32, #tpu.memory_space<vmem>>, vector<2x32xf32>
      %c0_49 = arith.constant 0 : index
      %c0_50 = arith.constant 0 : index
      %142 = vector.load %arg1[%c0_49, %c0_50] : memref<16x32xf32, #tpu.memory_space<vmem>>, vector<16x32xf32>
      %143 = vector.extract_strided_slice %141 {offsets = [0, 0], sizes = [1, 32], strides = [1, 1]} : vector<2x32xf32> to vector<1x32xf32>
      %144 = vector.extract_strided_slice %141 {offsets = [1, 0], sizes = [1, 32], strides = [1, 1]} : vector<2x32xf32> to vector<1x32xf32>
      %cst_51 = arith.constant dense<0.000000e+00> : vector<16xf32>
      %145 = vector.multi_reduction <add>, %142, %cst_51 [1] : vector<16x32xf32> to vector<16xf32>
      %146 = vector.shape_cast %145 : vector<16xf32> to vector<16x1xf32>
      %cst_52 = arith.constant 3.200000e+01 : f32
      %147 = vector.broadcast %cst_52 : f32 to vector<16x1xf32>
      %148 = arith.divf %146, %147 : vector<16x1xf32>
      %149 = vector.broadcast %148 : vector<16x1xf32> to vector<16x32xf32>
      %150 = arith.subf %142, %149 : vector<16x32xf32>
      %151 = arith.mulf %150, %150 : vector<16x32xf32>
      %cst_53 = arith.constant dense<0.000000e+00> : vector<16xf32>
      %152 = vector.multi_reduction <add>, %151, %cst_53 [1] : vector<16x32xf32> to vector<16xf32>
      %153 = vector.shape_cast %152 : vector<16xf32> to vector<16x1xf32>
      %cst_54 = arith.constant 3.200000e+01 : f32
      %154 = vector.broadcast %cst_54 : f32 to vector<16x1xf32>
      %155 = arith.divf %153, %154 : vector<16x1xf32>
      %156 = vector.broadcast %148 : vector<16x1xf32> to vector<16x32xf32>
      %157 = arith.subf %142, %156 : vector<16x32xf32>
      %cst_55 = arith.constant 9.99999996E-13 : f32
      %158 = vector.broadcast %cst_55 : f32 to vector<16x1xf32>
      %159 = arith.addf %155, %158 : vector<16x1xf32>
      %160 = math.rsqrt %159 : vector<16x1xf32>
      %161 = vector.broadcast %160 : vector<16x1xf32> to vector<16x32xf32>
      %162 = arith.mulf %157, %161 : vector<16x32xf32>
      %163 = vector.broadcast %143 : vector<1x32xf32> to vector<16x32xf32>
      %164 = arith.mulf %162, %163 : vector<16x32xf32>
      %165 = vector.broadcast %144 : vector<1x32xf32> to vector<16x32xf32>
      %166 = arith.addf %164, %165 : vector<16x32xf32>
      %c0_56 = arith.constant 0 : index
      %c0_57 = arith.constant 0 : index
      %167 = vector.load %arg11[%c0_56, %c0_57] : memref<16x32xf32, #tpu.memory_space<vmem>>, vector<16x32xf32>
      tpu.vector_store %arg11[%c0_56, %c0_57], %166 {strides = array<i32>} : memref<16x32xf32, #tpu.memory_space<vmem>>, vector<16x32xf32>,
    } else {
    }
    %c0 = arith.constant 0 : index
    %c0_1 = arith.constant 0 : index
    %3 = vector.load %arg11[%c0, %c0_1] : memref<16x32xf32, #tpu.memory_space<vmem>>, vector<16x32xf32>
    %c0_2 = arith.constant 0 : index
    %c0_3 = arith.constant 0 : index
    %c0_4 = arith.constant 0 : index
    %4 = vector.load %arg4[%c0_2, %c0_3, %c0_4] : memref<1x32x128xf32, #tpu.memory_space<vmem>>, vector<1x32x128xf32>
    %5 = vector.shape_cast %4 : vector<1x32x128xf32> to vector<32x128xf32>
    %c0_5 = arith.constant 0 : index
    %c0_6 = arith.constant 0 : index
    %c0_7 = arith.constant 0 : index
    %6 = vector.load %arg7[%c0_5, %c0_6, %c0_7] : memref<1x8x128xf32, #tpu.memory_space<vmem>>, vector<1x8x128xf32>
    %7 = vector.shape_cast %6 : vector<1x8x128xf32> to vector<8x128xf32>
    %8 = vector.extract_strided_slice %5 {offsets = [0, 0], sizes = [32, 96], strides = [1, 1]} : vector<32x128xf32> to vector<32x96xf32>
    %cst = arith.constant dense<0.000000e+00> : vector<16x96xf32>
    %9 = tpu.matmul %3, %8, %cst {dimension_numbers = #tpu.dot_dimension_numbers<[1], [0], [0], [1], [0, 0, 1, 1], [], []>} : vector<16x32xf32>, vector<32x96xf32>, vector<16x96xf32> -> vector<16x96xf32>
    %10 = vector.extract_strided_slice %7 {offsets = [0, 0], sizes = [1, 96], strides = [1, 1]} : vector<8x128xf32> to vector<1x96xf32>
    %11 = vector.broadcast %10 : vector<1x96xf32> to vector<16x96xf32>
    %12 = arith.addf %9, %11 : vector<16x96xf32>
    %13 = vector.shape_cast %12 : vector<16x96xf32> to vector<2x8x96xf32>
    %c0_8 = arith.constant 0 : index
    %c0_9 = arith.constant 0 : index
    %c0_10 = arith.constant 0 : index
    %14 = vector.load %arg3[%c0_8, %c0_9, %c0_10] : memref<2x1x8xf32, #tpu.memory_space<vmem>>, vector<2x1x8xf32>
    %15 = vector.shape_cast %14 : vector<2x1x8xf32> to vector<2x1x8xf32>
    %16 = vector.broadcast %15 : vector<2x1x8xf32> to vector<2x8x8xf32>
    %17 = vector.extract_strided_slice %5 {offsets = [0, 96], sizes = [32, 32], strides = [1, 1]} : vector<32x128xf32> to vector<32x32xf32>
    %cst_11 = arith.constant 0.000000e+00 : f32
    %18 = vector.broadcast %cst_11 : f32 to vector<16x32xf32>
    %19 = vector.extract_strided_slice %13 {offsets = [0, 0, 0], sizes = [2, 8, 16], strides = [1, 1, 1]} : vector<2x8x96xf32> to vector<2x8x16xf32>
    %20 = vector.extract_strided_slice %13 {offsets = [0, 0, 32], sizes = [2, 8, 16], strides = [1, 1, 1]} : vector<2x8x96xf32> to vector<2x8x16xf32>
    %21 = vector.extract_strided_slice %13 {offsets = [0, 0, 64], sizes = [2, 8, 16], strides = [1, 1, 1]} : vector<2x8x96xf32> to vector<2x8x16xf32>
    "tpu.trace_start"() <{level = 10 : i32, message = "bqd,bkd->bqk"}> : () -> ()
    %cst_12 = arith.constant dense<0.000000e+00> : vector<2x8x8xf32>
    %22 = tpu.matmul %19, %20, %cst_12 {dimension_numbers = #tpu.dot_dimension_numbers<[2], [2], [1], [1], [0, 0, 0, 1, 1, 1], [0], [0]>} : vector<2x8x16xf32>, vector<2x8x16xf32>, vector<2x8x8xf32> -> vector<2x8x8xf32>
    "tpu.trace_stop"() : () -> ()
    %23 = arith.addf %22, %16 : vector<2x8x8xf32>
    %cst_13 = arith.constant dense<0xFF800000> : vector<2x8xf32>
    %24 = vector.multi_reduction <maximumf>, %23, %cst_13 [2] : vector<2x8x8xf32> to vector<2x8xf32>
    %25 = vector.shape_cast %24 : vector<2x8xf32> to vector<2x8x1xf32>
    %26 = vector.broadcast %25 : vector<2x8x1xf32> to vector<2x8x8xf32>
    %27 = arith.subf %23, %26 : vector<2x8x8xf32>
    %28 = math.exp %27 : vector<2x8x8xf32>
    %cst_14 = arith.constant dense<0.000000e+00> : vector<2x8xf32>
    %29 = vector.multi_reduction <add>, %28, %cst_14 [2] : vector<2x8x8xf32> to vector<2x8xf32>
    %30 = vector.shape_cast %29 : vector<2x8xf32> to vector<2x8x1xf32>
    %31 = tpu.reciprocal %30 {approx = true} : vector<2x8x1xf32> -> vector<2x8x1xf32>
    %32 = vector.broadcast %31 : vector<2x8x1xf32> to vector<2x8x8xf32>
    %33 = arith.mulf %28, %32 : vector<2x8x8xf32>
    "tpu.trace_start"() <{level = 10 : i32, message = "bqk,bkd->bqd"}> : () -> ()
    %cst_15 = arith.constant dense<0.000000e+00> : vector<2x8x16xf32>
    %34 = tpu.matmul %33, %21, %cst_15 {dimension_numbers = #tpu.dot_dimension_numbers<[2], [1], [1], [2], [0, 0, 0, 1, 1, 2], [0], [0]>} : vector<2x8x8xf32>, vector<2x8x16xf32>, vector<2x8x16xf32> -> vector<2x8x16xf32>
    "tpu.trace_stop"() : () -> ()
    %35 = vector.shape_cast %34 : vector<2x8x16xf32> to vector<16x16xf32>
    %36 = vector.extract_strided_slice %17 {offsets = [0, 0], sizes = [16, 32], strides = [1, 1]} : vector<32x32xf32> to vector<16x32xf32>
    %cst_16 = arith.constant dense<0.000000e+00> : vector<16x32xf32>
    %37 = tpu.matmul %35, %36, %cst_16 {dimension_numbers = #tpu.dot_dimension_numbers<[1], [0], [0], [1], [0, 0, 1, 1], [], []>} : vector<16x16xf32>, vector<16x32xf32>, vector<16x32xf32> -> vector<16x32xf32>
    %38 = arith.addf %18, %37 : vector<16x32xf32>
    %39 = vector.extract_strided_slice %13 {offsets = [0, 0, 16], sizes = [2, 8, 16], strides = [1, 1, 1]} : vector<2x8x96xf32> to vector<2x8x16xf32>
    %40 = vector.extract_strided_slice %13 {offsets = [0, 0, 48], sizes = [2, 8, 16], strides = [1, 1, 1]} : vector<2x8x96xf32> to vector<2x8x16xf32>
    %41 = vector.extract_strided_slice %13 {offsets = [0, 0, 80], sizes = [2, 8, 16], strides = [1, 1, 1]} : vector<2x8x96xf32> to vector<2x8x16xf32>
    "tpu.trace_start"() <{level = 10 : i32, message = "bqd,bkd->bqk"}> : () -> ()
    %cst_17 = arith.constant dense<0.000000e+00> : vector<2x8x8xf32>
    %42 = tpu.matmul %39, %40, %cst_17 {dimension_numbers = #tpu.dot_dimension_numbers<[2], [2], [1], [1], [0, 0, 0, 1, 1, 1], [0], [0]>} : vector<2x8x16xf32>, vector<2x8x16xf32>, vector<2x8x8xf32> -> vector<2x8x8xf32>
    "tpu.trace_stop"() : () -> ()
    %43 = arith.addf %42, %16 : vector<2x8x8xf32>
    %cst_18 = arith.constant dense<0xFF800000> : vector<2x8xf32>
    %44 = vector.multi_reduction <maximumf>, %43, %cst_18 [2] : vector<2x8x8xf32> to vector<2x8xf32>
    %45 = vector.shape_cast %44 : vector<2x8xf32> to vector<2x8x1xf32>
    %46 = vector.broadcast %45 : vector<2x8x1xf32> to vector<2x8x8xf32>
    %47 = arith.subf %43, %46 : vector<2x8x8xf32>
    %48 = math.exp %47 : vector<2x8x8xf32>
    %cst_19 = arith.constant dense<0.000000e+00> : vector<2x8xf32>
    %49 = vector.multi_reduction <add>, %48, %cst_19 [2] : vector<2x8x8xf32> to vector<2x8xf32>
    %50 = vector.shape_cast %49 : vector<2x8xf32> to vector<2x8x1xf32>
    %51 = tpu.reciprocal %50 {approx = true} : vector<2x8x1xf32> -> vector<2x8x1xf32>
    %52 = vector.broadcast %51 : vector<2x8x1xf32> to vector<2x8x8xf32>
    %53 = arith.mulf %48, %52 : vector<2x8x8xf32>
    "tpu.trace_start"() <{level = 10 : i32, message = "bqk,bkd->bqd"}> : () -> ()
    %cst_20 = arith.constant dense<0.000000e+00> : vector<2x8x16xf32>
    %54 = tpu.matmul %53, %41, %cst_20 {dimension_numbers = #tpu.dot_dimension_numbers<[2], [1], [1], [2], [0, 0, 0, 1, 1, 2], [0], [0]>} : vector<2x8x8xf32>, vector<2x8x16xf32>, vector<2x8x16xf32> -> vector<2x8x16xf32>
    "tpu.trace_stop"() : () -> ()
    %55 = vector.shape_cast %54 : vector<2x8x16xf32> to vector<16x16xf32>
    %56 = vector.extract_strided_slice %17 {offsets = [16, 0], sizes = [16, 32], strides = [1, 1]} : vector<32x32xf32> to vector<16x32xf32>
    %cst_21 = arith.constant dense<0.000000e+00> : vector<16x32xf32>
    %57 = tpu.matmul %55, %56, %cst_21 {dimension_numbers = #tpu.dot_dimension_numbers<[1], [0], [0], [1], [0, 0, 1, 1], [], []>} : vector<16x16xf32>, vector<16x32xf32>, vector<16x32xf32> -> vector<16x32xf32>
    %58 = arith.addf %38, %57 : vector<16x32xf32>
    %59 = vector.extract_strided_slice %7 {offsets = [1, 0], sizes = [1, 32], strides = [1, 1]} : vector<8x128xf32> to vector<1x32xf32>
    %60 = vector.broadcast %59 : vector<1x32xf32> to vector<16x32xf32>
    %61 = arith.addf %58, %60 : vector<16x32xf32>
    %62 = arith.addf %3, %61 : vector<16x32xf32>
    %63 = vector.extract_strided_slice %7 {offsets = [4, 0], sizes = [1, 32], strides = [1, 1]} : vector<8x128xf32> to vector<1x32xf32>
    %64 = vector.extract_strided_slice %7 {offsets = [5, 0], sizes = [1, 32], strides = [1, 1]} : vector<8x128xf32> to vector<1x32xf32>
    %cst_22 = arith.constant dense<0.000000e+00> : vector<16xf32>
    %65 = vector.multi_reduction <add>, %62, %cst_22 [1] : vector<16x32xf32> to vector<16xf32>
    %66 = vector.shape_cast %65 : vector<16xf32> to vector<16x1xf32>
    %cst_23 = arith.constant 3.200000e+01 : f32
    %67 = vector.broadcast %cst_23 : f32 to vector<16x1xf32>
    %68 = arith.divf %66, %67 : vector<16x1xf32>
    %69 = vector.broadcast %68 : vector<16x1xf32> to vector<16x32xf32>
    %70 = arith.subf %62, %69 : vector<16x32xf32>
    %71 = arith.mulf %70, %70 : vector<16x32xf32>
    %cst_24 = arith.constant dense<0.000000e+00> : vector<16xf32>
    %72 = vector.multi_reduction <add>, %71, %cst_24 [1] : vector<16x32xf32> to vector<16xf32>
    %73 = vector.shape_cast %72 : vector<16xf32> to vector<16x1xf32>
    %cst_25 = arith.constant 3.200000e+01 : f32
    %74 = vector.broadcast %cst_25 : f32 to vector<16x1xf32>
    %75 = arith.divf %73, %74 : vector<16x1xf32>
    %76 = vector.broadcast %68 : vector<16x1xf32> to vector<16x32xf32>
    %77 = arith.subf %62, %76 : vector<16x32xf32>
    %cst_26 = arith.constant 9.99999996E-13 : f32
    %78 = vector.broadcast %cst_26 : f32 to vector<16x1xf32>
    %79 = arith.addf %75, %78 : vector<16x1xf32>
    %80 = math.rsqrt %79 : vector<16x1xf32>
    %81 = vector.broadcast %80 : vector<16x1xf32> to vector<16x32xf32>
    %82 = arith.mulf %77, %81 : vector<16x32xf32>
    %83 = vector.broadcast %63 : vector<1x32xf32> to vector<16x32xf32>
    %84 = arith.mulf %82, %83 : vector<16x32xf32>
    %85 = vector.broadcast %64 : vector<1x32xf32> to vector<16x32xf32>
    %86 = arith.addf %84, %85 : vector<16x32xf32>
    %c0_27 = arith.constant 0 : index
    %c0_28 = arith.constant 0 : index
    %c0_29 = arith.constant 0 : index
    %87 = vector.load %arg5[%c0_27, %c0_28, %c0_29] : memref<1x32x128xf32, #tpu.memory_space<vmem>>, vector<1x32x128xf32>
    %88 = vector.shape_cast %87 : vector<1x32x128xf32> to vector<32x128xf32>
    %cst_30 = arith.constant dense<0.000000e+00> : vector<16x128xf32>
    %89 = tpu.matmul %86, %88, %cst_30 {dimension_numbers = #tpu.dot_dimension_numbers<[1], [0], [0], [1], [0, 0, 1, 1], [], []>} : vector<16x32xf32>, vector<32x128xf32>, vector<16x128xf32> -> vector<16x128xf32>
    %90 = vector.extract_strided_slice %7 {offsets = [2, 0], sizes = [1, 128], strides = [1, 1]} : vector<8x128xf32> to vector<1x128xf32>
    %91 = vector.broadcast %90 : vector<1x128xf32> to vector<16x128xf32>
    %92 = arith.addf %89, %91 : vector<16x128xf32>
    %cst_31 = arith.constant 5.000000e-01 : f32
    %93 = vector.broadcast %cst_31 : f32 to vector<16x128xf32>
    %94 = arith.mulf %93, %92 : vector<16x128xf32>
    %cst_32 = arith.constant 4.471500e-02 : f32
    %95 = vector.broadcast %cst_32 : f32 to vector<16x128xf32>
    %96 = arith.mulf %95, %92 : vector<16x128xf32>
    %97 = arith.mulf %96, %92 : vector<16x128xf32>
    %98 = arith.mulf %97, %92 : vector<16x128xf32>
    %99 = arith.addf %92, %98 : vector<16x128xf32>
    %cst_33 = arith.constant 0.797884583 : f32
    %100 = vector.broadcast %cst_33 : f32 to vector<16x128xf32>
    %101 = arith.mulf %100, %99 : vector<16x128xf32>
    %102 = math.tanh %101 : vector<16x128xf32>
    %cst_34 = arith.constant 1.000000e+00 : f32
    %103 = vector.broadcast %cst_34 : f32 to vector<16x128xf32>
    %104 = arith.addf %103, %102 : vector<16x128xf32>
    %105 = arith.mulf %94, %104 : vector<16x128xf32>
    %c0_35 = arith.constant 0 : index
    %c0_36 = arith.constant 0 : index
    %c0_37 = arith.constant 0 : index
    %106 = vector.load %arg6[%c0_35, %c0_36, %c0_37] : memref<1x128x32xf32, #tpu.memory_space<vmem>>, vector<1x128x32xf32>
    %107 = vector.shape_cast %106 : vector<1x128x32xf32> to vector<128x32xf32>
    %cst_38 = arith.constant dense<0.000000e+00> : vector<16x32xf32>
    %108 = tpu.matmul %105, %107, %cst_38 {dimension_numbers = #tpu.dot_dimension_numbers<[1], [0], [0], [1], [0, 0, 1, 1], [], []>} : vector<16x128xf32>, vector<128x32xf32>, vector<16x32xf32> -> vector<16x32xf32>
    %109 = vector.extract_strided_slice %7 {offsets = [3, 0], sizes = [1, 32], strides = [1, 1]} : vector<8x128xf32> to vector<1x32xf32>
    %110 = vector.broadcast %109 : vector<1x32xf32> to vector<16x32xf32>
    %111 = arith.addf %108, %110 : vector<16x32xf32>
    %112 = arith.addf %86, %111 : vector<16x32xf32>
    %113 = vector.extract_strided_slice %7 {offsets = [6, 0], sizes = [1, 32], strides = [1, 1]} : vector<8x128xf32> to vector<1x32xf32>
    %114 = vector.extract_strided_slice %7 {offsets = [7, 0], sizes = [1, 32], strides = [1, 1]} : vector<8x128xf32> to vector<1x32xf32>
    %cst_39 = arith.constant dense<0.000000e+00> : vector<16xf32>
    %115 = vector.multi_reduction <add>, %112, %cst_39 [1] : vector<16x32xf32> to vector<16xf32>
    %116 = vector.shape_cast %115 : vector<16xf32> to vector<16x1xf32>
    %cst_40 = arith.constant 3.200000e+01 : f32
    %117 = vector.broadcast %cst_40 : f32 to vector<16x1xf32>
    %118 = arith.divf %116, %117 : vector<16x1xf32>
    %119 = vector.broadcast %118 : vector<16x1xf32> to vector<16x32xf32>
    %120 = arith.subf %112, %119 : vector<16x32xf32>
    %121 = arith.mulf %120, %120 : vector<16x32xf32>
    %cst_41 = arith.constant dense<0.000000e+00> : vector<16xf32>
    %122 = vector.multi_reduction <add>, %121, %cst_41 [1] : vector<16x32xf32> to vector<16xf32>
    %123 = vector.shape_cast %122 : vector<16xf32> to vector<16x1xf32>
    %cst_42 = arith.constant 3.200000e+01 : f32
    %124 = vector.broadcast %cst_42 : f32 to vector<16x1xf32>
    %125 = arith.divf %123, %124 : vector<16x1xf32>
    %126 = vector.broadcast %118 : vector<16x1xf32> to vector<16x32xf32>
    %127 = arith.subf %112, %126 : vector<16x32xf32>
    %cst_43 = arith.constant 9.99999996E-13 : f32
    %128 = vector.broadcast %cst_43 : f32 to vector<16x1xf32>
    %129 = arith.addf %125, %128 : vector<16x1xf32>
    %130 = math.rsqrt %129 : vector<16x1xf32>
    %131 = vector.broadcast %130 : vector<16x1xf32> to vector<16x32xf32>
    %132 = arith.mulf %127, %131 : vector<16x32xf32>
    %133 = vector.broadcast %113 : vector<1x32xf32> to vector<16x32xf32>
    %134 = arith.mulf %132, %133 : vector<16x32xf32>
    %135 = vector.broadcast %114 : vector<1x32xf32> to vector<16x32xf32>
    %136 = arith.addf %134, %135 : vector<16x32xf32>
    %c0_44 = arith.constant 0 : index
    %c0_45 = arith.constant 0 : index
    %137 = vector.load %arg11[%c0_44, %c0_45] : memref<16x32xf32, #tpu.memory_space<vmem>>, vector<16x32xf32>
    tpu.vector_store %arg11[%c0_44, %c0_45], %136 {strides = array<i32>} : memref<16x32xf32, #tpu.memory_space<vmem>>, vector<16x32xf32>,
    %c1_i32 = arith.constant 1 : i32
    %138 = arith.cmpi eq, %arg0, %c1_i32 : i32
    %139 = arith.extui %138 : i1 to i32
    %c0_i32_46 = arith.constant 0 : i32
    %140 = arith.cmpi ne, %139, %c0_i32_46 : i32
    scf.if %140 {
      %c0_47 = arith.constant 0 : index
      %c0_48 = arith.constant 0 : index
      %141 = vector.load %arg8[%c0_47, %c0_48] : memref<32x128xf32, #tpu.memory_space<vmem>>, vector<32x128xf32>
      %cst_49 = arith.constant dense<0.000000e+00> : vector<16x128xf32>
      %142 = tpu.matmul %136, %141, %cst_49 {dimension_numbers = #tpu.dot_dimension_numbers<[1], [0], [0], [1], [0, 0, 1, 1], [], []>} : vector<16x32xf32>, vector<32x128xf32>, vector<16x128xf32> -> vector<16x128xf32>
      %c0_50 = arith.constant 0 : index
      %c0_51 = arith.constant 0 : index
      %143 = vector.load %arg9[%c0_50, %c0_51] : memref<1x128xf32, #tpu.memory_space<vmem>>, vector<1x128xf32>
      %144 = vector.broadcast %143 : vector<1x128xf32> to vector<16x128xf32>
      %145 = arith.addf %142, %144 : vector<16x128xf32>
      %c0_52 = arith.constant 0 : index
      %c0_53 = arith.constant 0 : index
      %146 = vector.load %arg10[%c0_52, %c0_53] : memref<16x128xf32, #tpu.memory_space<vmem>>, vector<16x128xf32>
      tpu.vector_store %arg10[%c0_52, %c0_53], %145 {strides = array<i32>} : memref<16x128xf32, #tpu.memory_space<vmem>>, vector<16x128xf32>,
    } else {
    }
    return
  }
  func.func @transform_0(%arg0: i32) -> (i32, i32) {
    %c0_i32 = arith.constant 0 : i32
    %c0_i32_0 = arith.constant 0 : i32
    %c0_i32_1 = arith.constant 0 : i32
    return %c0_i32, %c0_i32_0 : i32, i32
  }
  func.func @transform_1(%arg0: i32) -> (i32, i32) {
    %c0_i32 = arith.constant 0 : i32
    %c0_i32_0 = arith.constant 0 : i32
    %c0_i32_1 = arith.constant 0 : i32
    return %c0_i32, %c0_i32_0 : i32, i32
  }
  func.func @transform_2(%arg0: i32) -> (i32, i32, i32) {
    %c0_i32 = arith.constant 0 : i32
    %c0_i32_0 = arith.constant 0 : i32
    %c0_i32_1 = arith.constant 0 : i32
    %c0_i32_2 = arith.constant 0 : i32
    return %c0_i32, %c0_i32_0, %c0_i32_1 : i32, i32, i32
  }
  func.func @transform_3(%arg0: i32) -> (i32, i32, i32) {
    %c0_i32 = arith.constant 0 : i32
    %c0_i32_0 = arith.constant 0 : i32
    %c0_i32_1 = arith.constant 0 : i32
    return %arg0, %c0_i32, %c0_i32_0 : i32, i32, i32
  }
  func.func @transform_4(%arg0: i32) -> (i32, i32, i32) {
    %c0_i32 = arith.constant 0 : i32
    %c0_i32_0 = arith.constant 0 : i32
    %c0_i32_1 = arith.constant 0 : i32
    return %arg0, %c0_i32, %c0_i32_0 : i32, i32, i32
  }
  func.func @transform_5(%arg0: i32) -> (i32, i32, i32) {
    %c0_i32 = arith.constant 0 : i32
    %c0_i32_0 = arith.constant 0 : i32
    %c0_i32_1 = arith.constant 0 : i32
    return %arg0, %c0_i32, %c0_i32_0 : i32, i32, i32
  }
  func.func @transform_6(%arg0: i32) -> (i32, i32, i32) {
    %c0_i32 = arith.constant 0 : i32
    %c0_i32_0 = arith.constant 0 : i32
    %c0_i32_1 = arith.constant 0 : i32
    return %arg0, %c0_i32, %c0_i32_0 : i32, i32, i32
  }
  func.func @transform_7(%arg0: i32) -> (i32, i32) {
    %c0_i32 = arith.constant 0 : i32
    %c0_i32_0 = arith.constant 0 : i32
    %c0_i32_1 = arith.constant 0 : i32
    return %c0_i32, %c0_i32_0 : i32, i32
  }
  func.func @transform_8(%arg0: i32) -> (i32, i32) {
    %c0_i32 = arith.constant 0 : i32
    %c0_i32_0 = arith.constant 0 : i32
    %c0_i32_1 = arith.constant 0 : i32
    return %c0_i32, %c0_i32_0 : i32, i32
  }
  func.func @transform_9(%arg0: i32) -> (i32, i32) {
    %c0_i32 = arith.constant 0 : i32
    %c0_i32_0 = arith.constant 0 : i32
    %c0_i32_1 = arith.constant 0 : i32
    return %c0_i32, %c0_i32_0 : i32, i32
  }
}

</mosaic_0001>

<llo_original>
// kernel: multitask_forward.1
$region0: #{multitask_forward.1}
  #allocation0 [shape = 'u32[]', space=smem, size = 0x4, offset = 0x4, fixed_abs, tag = 'smem constant byte address 0x4 - core index']
  #allocation1 [shape = 'u32[144,128]{1,0:T(1,128)}', space=vmem, size = 0x12000, scoped, tag = 'internal scratch']
  #allocation2 [shape = 'f32[16,32]{1,0:T(8,128)}', space=vmem, size = 0x2000, scoped, tag = 'scratch operand']
  %s0 = inlined_call_operand.vmem [shape: f32[16,32], index: 0, kind: input, shape index: {}]
  %s1 = inlined_call_operand.vmem [shape: f32[2,32], index: 1, kind: input, shape index: {}]
  %s2 = inlined_call_operand.vmem [shape: f32[2,1,8], index: 2, kind: input, shape index: {}]
  %s3 = inlined_call_operand.vmem [shape: f32[2,32,128], index: 3, kind: input, shape index: {}]
  %s4 = inlined_call_operand.vmem [shape: f32[2,32,128], index: 4, kind: input, shape index: {}]
  %s5 = inlined_call_operand.vmem [shape: f32[2,128,32], index: 5, kind: input, shape index: {}]
  %s6 = inlined_call_operand.vmem [shape: f32[2,8,128], index: 6, kind: input, shape index: {}]
  %s7 = inlined_call_operand.vmem [shape: f32[32,128], index: 7, kind: input, shape index: {}]
  %s8 = inlined_call_operand.vmem [shape: f32[1,128], index: 8, kind: input, shape index: {}]
  %s9 = inlined_call_operand.vmem [shape: f32[16,128], index: 9, kind: output, shape index: {}]
  %s10 = sld [smem:[#allocation0]]
  $region77: #{multitask_forward.1} parent=0
    _
  %s12 = ssub.s32 1, %s10
  %s13 = scalar_select 0, %s12, %s10
  loop: start=0, step=1, limit=4
  $region2: #{multitask_forward.1} parent=0 // loop_pre_header
    _
  $region3: #{multitask_forward.1} parent=0 // loop_header
    %s15 = sphi 0, %s19
    %p16 = scmp.ge.s32.totalorder %s15, 4
    %s23 = sphi 0, %s23
    %s25 = sphi 0, %s23
    %s26 = sphi 0, %s25
    %s40 = sphi 0, %s26
    %s44 = sphi 0, %s44
    %s46 = sphi 0, %s44
    %s47 = sphi 0, %s46
    %s61 = sphi 0, %s47
    %s65 = sphi 0, %s65
    %s67 = sphi 0, %s65
    %s68 = sphi 0, %s67
    %s82 = sphi 0, %s68
    %s88 = sphi 0, %s90
    %s91 = sphi 0, %s88
    %s92 = sphi 0, %s91
    %s108 = sphi 0, %s92
    %s114 = sphi 0, %s116
    %s117 = sphi 0, %s114
    %s118 = sphi 0, %s117
    %s134 = sphi 0, %s118
    %s140 = sphi 0, %s142
    %s143 = sphi 0, %s140
    %s144 = sphi 0, %s143
    %s160 = sphi 0, %s144
    %s166 = sphi 0, %s168
    %s169 = sphi 0, %s166
    %s170 = sphi 0, %s169
    %s186 = sphi 0, %s170
    %s190 = sphi 0, %s190
    %s192 = sphi 0, %s190
    %s193 = sphi 0, %s192
    %s207 = sphi 0, %s193
    %s211 = sphi 0, %s211
    %s213 = sphi 0, %s211
    %s214 = sphi 0, %s213
    %s228 = sphi 0, %s214
    %s232 = sphi 0, %s232
    %s234 = sphi 0, %s232
    %s235 = sphi 0, %s234
    %s249 = sphi 0, %s235
  $region4: #{multitask_forward.1} parent=0 // loop_header_branch
    %18 = sbr.rel (%p16) target = $region8
  $region5: #{multitask_forward.1} parent=0 // loop_body
    %s20 = ssub.s32 %s15, 1
    %s21 = ssub.s32 %s15, 2
    %s22 = sadd.s32 %s15, 1
    %s24 = sadd.s32 %s23, 1
    %p27 = scmp.eq.s32.totalorder %s15, 1
    %p28 = scmp.ne.s32.totalorder %s23, %s25
    %p29 = scmp.eq.s32.totalorder %s15, 0
    %p30 = por %p28, %p29
    %p31 = scmp.ne.s32.totalorder %s23, %s25
    %p32 = scmp.eq.s32.totalorder %s20, 1
    %p33 = por %p31, %p32
    %p34 = scmp.ne.s32.totalorder %s25, %s26
    %p35 = scmp.eq.s32.totalorder %s20, 0
    %p36 = por %p34, %p35
    %p37 = scmp.ne.s32.totalorder %s25, %s26
    %p38 = scmp.eq.s32.totalorder %s21, 1
    %p39 = por %p37, %p38
    %p41 = scmp.ne.s32.totalorder %s26, %s40
    %p42 = scmp.eq.s32.totalorder %s21, 0
    %p43 = por %p41, %p42
    %s45 = sadd.s32 %s44, 1
    %p48 = scmp.eq.s32.totalorder %s15, 1
    %p49 = scmp.ne.s32.totalorder %s44, %s46
    %p50 = scmp.eq.s32.totalorder %s15, 0
    %p51 = por %p49, %p50
    %p52 = scmp.ne.s32.totalorder %s44, %s46
    %p53 = scmp.eq.s32.totalorder %s20, 1
    %p54 = por %p52, %p53
    %p55 = scmp.ne.s32.totalorder %s46, %s47
    %p56 = scmp.eq.s32.totalorder %s20, 0
    %p57 = por %p55, %p56
    %p58 = scmp.ne.s32.totalorder %s46, %s47
    %p59 = scmp.eq.s32.totalorder %s21, 1
    %p60 = por %p58, %p59
    %p62 = scmp.ne.s32.totalorder %s47, %s61
    %p63 = scmp.eq.s32.totalorder %s21, 0
    %p64 = por %p62, %p63
    %s66 = sadd.s32 %s65, 1
    %p69 = scmp.eq.s32.totalorder %s15, 1
    %p70 = scmp.ne.s32.totalorder %s65, %s67
    %p71 = scmp.eq.s32.totalorder %s15, 0
    %p72 = por %p70, %p71
    %p73 = scmp.ne.s32.totalorder %s65, %s67
    %p74 = scmp.eq.s32.totalorder %s20, 1
    %p75 = por %p73, %p74
    %p76 = scmp.ne.s32.totalorder %s67, %s68
    %p77 = scmp.eq.s32.totalorder %s20, 0
    %p78 = por %p76, %p77
    %p79 = scmp.ne.s32.totalorder %s67, %s68
    %p80 = scmp.eq.s32.totalorder %s21, 1
    %p81 = por %p79, %p80
    %p83 = scmp.ne.s32.totalorder %s68, %s82
    %p84 = scmp.eq.s32.totalorder %s21, 0
    %p85 = por %p83, %p84
    %s86 = ssub.s32 %s15, %s22
    %p87 = scmp.eq.s32.totalorder %s86, 0
    %s89 = sadd.s32 %s88, 1
    %s90 = scalar_select %p87, %s88, %s89
    %p93 = pneg %p87
    %p94 = scmp.eq.s32.totalorder %s15, 1
    %p95 = por %p93, %p94
    %p96 = scmp.ne.s32.totalorder %s88, %s91
    %p97 = scmp.eq.s32.totalorder %s15, 0
    %p98 = por %p96, %p97
    %p99 = scmp.ne.s32.totalorder %s88, %s91
    %p100 = scmp.eq.s32.totalorder %s20, 1
    %p101 = por %p99, %p100
    %p102 = scmp.ne.s32.totalorder %s91, %s92
    %p103 = scmp.eq.s32.totalorder %s20, 0
    %p104 = por %p102, %p103
    %p105 = scmp.ne.s32.totalorder %s91, %s92
    %p106 = scmp.eq.s32.totalorder %s21, 1
    %p107 = por %p105, %p106
    %p109 = scmp.ne.s32.totalorder %s92, %s108
    %p110 = scmp.eq.s32.totalorder %s21, 0
    %p111 = por %p109, %p110
    %s112 = ssub.s32 %s15, %s22
    %p113 = scmp.eq.s32.totalorder %s112, 0
    %s115 = sadd.s32 %s114, 1
    %s116 = scalar_select %p113, %s114, %s115
    %p119 = pneg %p113
    %p120 = scmp.eq.s32.totalorder %s15, 1
    %p121 = por %p119, %p120
    %p122 = scmp.ne.s32.totalorder %s114, %s117
    %p123 = scmp.eq.s32.totalorder %s15, 0
    %p124 = por %p122, %p123
    %p125 = scmp.ne.s32.totalorder %s114, %s117
    %p126 = scmp.eq.s32.totalorder %s20, 1
    %p127 = por %p125, %p126
    %p128 = scmp.ne.s32.totalorder %s117, %s118
    %p129 = scmp.eq.s32.totalorder %s20, 0
    %p130 = por %p128, %p129
    %p131 = scmp.ne.s32.totalorder %s117, %s118
    %p132 = scmp.eq.s32.totalorder %s21, 1
    %p133 = por %p131, %p132
    %p135 = scmp.ne.s32.totalorder %s118, %s134
    %p136 = scmp.eq.s32.totalorder %s21, 0
    %p137 = por %p135, %p136
    %s138 = ssub.s32 %s15, %s22
    %p139 = scmp.eq.s32.totalorder %s138, 0
    %s141 = sadd.s32 %s140, 1
    %s142 = scalar_select %p139, %s140, %s141
    %p145 = pneg %p139
    %p146 = scmp.eq.s32.totalorder %s15, 1
    %p147 = por %p145, %p146
    %p148 = scmp.ne.s32.totalorder %s140, %s143
    %p149 = scmp.eq.s32.totalorder %s15, 0
    %p150 = por %p148, %p149
    %p151 = scmp.ne.s32.totalorder %s140, %s143
    %p152 = scmp.eq.s32.totalorder %s20, 1
    %p153 = por %p151, %p152
    %p154 = scmp.ne.s32.totalorder %s143, %s144
    %p155 = scmp.eq.s32.totalorder %s20, 0
    %p156 = por %p154, %p155
    %p157 = scmp.ne.s32.totalorder %s143, %s144
    %p158 = scmp.eq.s32.totalorder %s21, 1
    %p159 = por %p157, %p158
    %p161 = scmp.ne.s32.totalorder %s144, %s160
    %p162 = scmp.eq.s32.totalorder %s21, 0
    %p163 = por %p161, %p162
    %s164 = ssub.s32 %s15, %s22
    %p165 = scmp.eq.s32.totalorder %s164, 0
    %s167 = sadd.s32 %s166, 1
    %s168 = scalar_select %p165, %s166, %s167
    %p171 = pneg %p165
    %p172 = scmp.eq.s32.totalorder %s15, 1
    %p173 = por %p171, %p172
    %p174 = scmp.ne.s32.totalorder %s166, %s169
    %p175 = scmp.eq.s32.totalorder %s15, 0
    %p176 = por %p174, %p175
    %p177 = scmp.ne.s32.totalorder %s166, %s169
    %p178 = scmp.eq.s32.totalorder %s20, 1
    %p179 = por %p177, %p178
    %p180 = scmp.ne.s32.totalorder %s169, %s170
    %p181 = scmp.eq.s32.totalorder %s20, 0
    %p182 = por %p180, %p181
    %p183 = scmp.ne.s32.totalorder %s169, %s170
    %p184 = scmp.eq.s32.totalorder %s21, 1
    %p185 = por %p183, %p184
    %p187 = scmp.ne.s32.totalorder %s170, %s186
    %p188 = scmp.eq.s32.totalorder %s21, 0
    %p189 = por %p187, %p188
    %s191 = sadd.s32 %s190, 1
    %p194 = scmp.eq.s32.totalorder %s15, 1
    %p195 = scmp.ne.s32.totalorder %s190, %s192
    %p196 = scmp.eq.s32.totalorder %s15, 0
    %p197 = por %p195, %p196
    %p198 = scmp.ne.s32.totalorder %s190, %s192
    %p199 = scmp.eq.s32.totalorder %s20, 1
    %p200 = por %p198, %p199
    %p201 = scmp.ne.s32.totalorder %s192, %s193
    %p202 = scmp.eq.s32.totalorder %s20, 0
    %p203 = por %p201, %p202
    %p204 = scmp.ne.s32.totalorder %s192, %s193
    %p205 = scmp.eq.s32.totalorder %s21, 1
    %p206 = por %p204, %p205
    %p208 = scmp.ne.s32.totalorder %s193, %s207
    %p209 = scmp.eq.s32.totalorder %s21, 0
    %p210 = por %p208, %p209
    %s212 = sadd.s32 %s211, 1
    %p215 = scmp.eq.s32.totalorder %s15, 1
    %p216 = scmp.ne.s32.totalorder %s211, %s213
    %p217 = scmp.eq.s32.totalorder %s15, 0
    %p218 = por %p216, %p217
    %p219 = scmp.ne.s32.totalorder %s211, %s213
    %p220 = scmp.eq.s32.totalorder %s20, 1
    %p221 = por %p219, %p220
    %p222 = scmp.ne.s32.totalorder %s213, %s214
    %p223 = scmp.eq.s32.totalorder %s20, 0
    %p224 = por %p222, %p223
    %p225 = scmp.ne.s32.totalorder %s213, %s214
    %p226 = scmp.eq.s32.totalorder %s21, 1
    %p227 = por %p225, %p226
    %p229 = scmp.ne.s32.totalorder %s214, %s228
    %p230 = scmp.eq.s32.totalorder %s21, 0
    %p231 = por %p229, %p230
    %s233 = sadd.s32 %s232, 1
    %p236 = scmp.eq.s32.totalorder %s15, 1
    %p237 = scmp.ne.s32.totalorder %s232, %s234
    %p238 = scmp.eq.s32.totalorder %s15, 0
    %p239 = por %p237, %p238
    %p240 = scmp.ne.s32.totalorder %s232, %s234
    %p241 = scmp.eq.s32.totalorder %s20, 1
    %p242 = por %p240, %p241
    %p243 = scmp.ne.s32.totalorder %s234, %s235
    %p244 = scmp.eq.s32.totalorder %s20, 0
    %p245 = por %p243, %p244
    %p246 = scmp.ne.s32.totalorder %s234, %s235
    %p247 = scmp.eq.s32.totalorder %s21, 1
    %p248 = por %p246, %p247
    %p250 = scmp.ne.s32.totalorder %s235, %s249
    %p251 = scmp.eq.s32.totalorder %s21, 0
    %p252 = por %p250, %p251
    %p253 = scmp.le.s32.totalorder 1, %s15
    %p254 = scmp.lt.s32.totalorder %s15, 3
    %p255 = pnand %p253, %p254
    %p256 = pneg %p255
    // Predicated region
    $region9: #{multitask_forward.1} parent=5 // pred_check
      _
    $region10: #{multitask_forward.1} parent=5 // pred_check_branch
      %258 = sbr.rel (%p255) target = $region12
    $region11: #{multitask_forward.1} parent=5 // pred_region
      %s259 = ssub.s32 %s15, 1
      // Predicated region
      $region13: #{multitask_forward.1} parent=11 // pred_check
        %p260 = pneg %p36
      $region14: #{multitask_forward.1} parent=11 // pred_check_branch
        %262 = sbr.rel (%p260) target = $region16
      $region15: #{multitask_forward.1} parent=11 // pred_region
        _
      $region16: #{multitask_forward.1} parent=11 // pred_fallthru
        _
      // Predicated region
      $region17: #{multitask_forward.1} parent=11 // pred_check
        %p263 = pneg %p57
      $region18: #{multitask_forward.1} parent=11 // pred_check_branch
        %265 = sbr.rel (%p263) target = $region20
      $region19: #{multitask_forward.1} parent=11 // pred_region
        _
      $region20: #{multitask_forward.1} parent=11 // pred_fallthru
        _
      // Predicated region
      $region21: #{multitask_forward.1} parent=11 // pred_check
        %p266 = pneg %p78
      $region22: #{multitask_forward.1} parent=11 // pred_check_branch
        %268 = sbr.rel (%p266) target = $region24
      $region23: #{multitask_forward.1} parent=11 // pred_region
        _
      $region24: #{multitask_forward.1} parent=11 // pred_fallthru
        _
      // Predicated region
      $region25: #{multitask_forward.1} parent=11 // pred_check
        %p269 = pneg %p203
      $region26: #{multitask_forward.1} parent=11 // pred_check_branch
        %271 = sbr.rel (%p269) target = $region28
      $region27: #{multitask_forward.1} parent=11 // pred_region
        _
      $region28: #{multitask_forward.1} parent=11 // pred_fallthru
        _
      // Predicated region
      $region29: #{multitask_forward.1} parent=11 // pred_check
        %p272 = pneg %p224
      $region30: #{multitask_forward.1} parent=11 // pred_check_branch
        %274 = sbr.rel (%p272) target = $region32
      $region31: #{multitask_forward.1} parent=11 // pred_region
        _
      $region32: #{multitask_forward.1} parent=11 // pred_fallthru
        _
    $region12: #{multitask_forward.1} parent=5 // pred_fallthru
      _
    %p275 = scmp.lt.s32.totalorder %s15, 2
    // Predicated region
    $region33: #{multitask_forward.1} parent=5 // pred_check
      %p276 = pneg %p275
    $region34: #{multitask_forward.1} parent=5 // pred_check_branch
      %278 = sbr.rel (%p276) target = $region36
    $region35: #{multitask_forward.1} parent=5 // pred_region
      // Predicated region
      $region37: #{multitask_forward.1} parent=35 // pred_check
        %p279 = pneg %p98
      $region38: #{multitask_forward.1} parent=35 // pred_check_branch
        %281 = sbr.rel (%p279) target = $region40
      $region39: #{multitask_forward.1} parent=35 // pred_region
        %p282 = scmp.lt.s32.totalorder %s15, 1
        %s283 = scalar_select %p282, %s15, 1
        %s284 = smul.addr %s283, 4
        %s285 = smul.addr %s284, 8
        %s286 = scalar_lea.vmem %s3, %s285
      $region40: #{multitask_forward.1} parent=35 // pred_fallthru
        _
      // Predicated region
      $region41: #{multitask_forward.1} parent=35 // pred_check
        %p287 = pneg %p124
      $region42: #{multitask_forward.1} parent=35 // pred_check_branch
        %289 = sbr.rel (%p287) target = $region44
      $region43: #{multitask_forward.1} parent=35 // pred_region
        %p290 = scmp.lt.s32.totalorder %s15, 1
        %s291 = scalar_select %p290, %s15, 1
        %s292 = smul.addr %s291, 4
        %s293 = smul.addr %s292, 8
        %s294 = scalar_lea.vmem %s4, %s293
      $region44: #{multitask_forward.1} parent=35 // pred_fallthru
        _
      // Predicated region
      $region45: #{multitask_forward.1} parent=35 // pred_check
        %p295 = pneg %p150
      $region46: #{multitask_forward.1} parent=35 // pred_check_branch
        %297 = sbr.rel (%p295) target = $region48
      $region47: #{multitask_forward.1} parent=35 // pred_region
        %p298 = scmp.lt.s32.totalorder %s15, 1
        %s299 = scalar_select %p298, %s15, 1
        %s300 = smul.addr %s299, 16
        %s301 = smul.addr %s300, 8
        %s302 = scalar_lea.vmem %s5, %s301
      $region48: #{multitask_forward.1} parent=35 // pred_fallthru
        _
      // Predicated region
      $region49: #{multitask_forward.1} parent=35 // pred_check
        %p303 = pneg %p176
      $region50: #{multitask_forward.1} parent=35 // pred_check_branch
        %305 = sbr.rel (%p303) target = $region52
      $region51: #{multitask_forward.1} parent=35 // pred_region
        %p306 = scmp.lt.s32.totalorder %s15, 1
        %s307 = scalar_select %p306, %s15, 1
        %s308 = smul.addr %s307, 8
        %s309 = scalar_lea.vmem %s6, %s308
      $region52: #{multitask_forward.1} parent=35 // pred_fallthru
        _
    $region36: #{multitask_forward.1} parent=5 // pred_fallthru
      _
    %p310 = scmp.le.s32.totalorder 1, %s15
    %p311 = scmp.lt.s32.totalorder %s15, 3
    %p312 = pnand %p310, %p311
    %p313 = pneg %p312
    // Predicated region
    $region53: #{multitask_forward.1} parent=5 // pred_check
      _
    $region54: #{multitask_forward.1} parent=5 // pred_check_branch
      %315 = sbr.rel (%p312) target = $region56
    $region55: #{multitask_forward.1} parent=5 // pred_region
      %s316 = ssub.s32 %s15, 1
      %p317 = pneg %p36
      %p318 = pneg %p33
      %p319 = pneg %p57
      %p320 = pneg %p54
      %p321 = pneg %p78
      %p322 = pneg %p75
      %p323 = scmp.lt.s32.totalorder %s20, 1
      %s324 = scalar_select %p323, %s20, 1
      %s325 = smul.addr %s324, 4
      %s326 = smul.addr %s325, 8
      %s327 = scalar_lea.vmem %s3, %s326
      %p328 = pneg %p104
      %p329 = pneg %p101
      %p330 = scmp.lt.s32.totalorder %s20, 1
      %s331 = scalar_select %p330, %s20, 1
      %s332 = smul.addr %s331, 4
      %s333 = smul.addr %s332, 8
      %s334 = scalar_lea.vmem %s4, %s333
      %p335 = pneg %p130
      %p336 = pneg %p127
      %p337 = scmp.lt.s32.totalorder %s20, 1
      %s338 = scalar_select %p337, %s20, 1
      %s339 = smul.addr %s338, 16
      %s340 = smul.addr %s339, 8
      %s341 = scalar_lea.vmem %s5, %s340
      %p342 = pneg %p156
      %p343 = pneg %p153
      %p344 = scmp.lt.s32.totalorder %s20, 1
      %s345 = scalar_select %p344, %s20, 1
      %s346 = smul.addr %s345, 8
      %s347 = scalar_lea.vmem %s6, %s346
      %p348 = pneg %p182
      %p349 = pneg %p179
      %p350 = pneg %p203
      %p351 = pneg %p200
      %p352 = pneg %p224
      %p353 = pneg %p221
      %p354 = pneg %p245
      %p355 = pneg %p242
      %p356 = scmp.lt.s32.totalorder %s20, 1
      %s357 = scalar_select %p356, %s20, 1
      %s358 = smul.addr %s357, 4
      %s359 = smul.addr %s358, 8
      %s360 = scalar_lea.vmem %s3, %s359
      %p361 = scmp.lt.s32.totalorder %s20, 1
      %s362 = scalar_select %p361, %s20, 1
      %s363 = smul.addr %s362, 4
      %s364 = smul.addr %s363, 8
      %s365 = scalar_lea.vmem %s4, %s364
      %p366 = scmp.lt.s32.totalorder %s20, 1
      %s367 = scalar_select %p366, %s20, 1
      %s368 = smul.addr %s367, 16
      %s369 = smul.addr %s368, 8
      %s370 = scalar_lea.vmem %s5, %s369
      %p371 = scmp.lt.s32.totalorder %s20, 1
      %s372 = scalar_select %p371, %s20, 1
      %s373 = smul.addr %s372, 8
      %s374 = scalar_lea.vmem %s6, %s373
      %p375 = scmp.eq.s32.totalorder %s20, 0
      // Predicated region
      $region57: #{multitask_forward.1} parent=55 // pred_check
        %p376 = pneg %p375
      $region58: #{multitask_forward.1} parent=55 // pred_check_branch
        %378 = sbr.rel (%p376) target = $region60
      $region59: #{multitask_forward.1} parent=55 // pred_region
        %v379 = vld [vmem:[%s1] sm:$0x3]
        %v380 = vld [vmem:[%s0] sm:$0xff]
        %v381 = vld [vmem:[%s0 + $0x8] sm:$0xff]
        %vm382 = vcmask 261120
        %v383 = vsel %vm382, %v380, 0.0
        %384 = vadd.xlane.f32.xlu0 %v383
        %v385 = vpop.xlane.xlu0 %384
        %v386 = vsel %vm382, %v381, 0.0
        %387 = vadd.xlane.f32.xlu0 %v386
        %v388 = vpop.xlane.xlu0 %387
        %v389 = vrcp.pop 32.0
        %v390 = vmul.f32 %v385, %v389
        %v391 = vmul.f32 %v388, %v389
        %v392 = vsub.f32 %v380, %v390
        %v393 = vsub.f32 %v381, %v391
        %v394 = vmul.f32 %v392, %v392
        %v395 = vmul.f32 %v393, %v393
        %v396 = vsel %vm382, %v394, 0.0
        %397 = vadd.xlane.f32.xlu0 %v396
        %v398 = vpop.xlane.xlu0 %397
        %v399 = vsel %vm382, %v395, 0.0
        %400 = vadd.xlane.f32.xlu0 %v399
        %v401 = vpop.xlane.xlu0 %400
        %v402 = vmul.f32 %v398, %v389
        %v403 = vmul.f32 %v401, %v389
        %v404 = vadd.f32 %v402, 1e-12
        %v405 = vadd.f32 %v403, 1e-12
        %v406 = vrsqrt.pop %v404
        %v407 = vrsqrt.pop %v405
        %v408 = vmul.f32 %v392, %v406
        %v409 = vmul.f32 %v393, %v407
        %v410 = vlaneseq
        %v411 = vshrl.u32 %v410, 7
        %v412 = vsub.s32 0, %v411
        %v413 = vrot.slane %v379, %v412
        %v414 = vmul.f32 %v408, %v413
        %v415 = vmul.f32 %v409, %v413
        %v416 = vlaneseq
        %v417 = vshrl.u32 %v416, 7
        %v418 = vsub.s32 1, %v417
        %v419 = vrot.slane %v379, %v418
        %v420 = vadd.f32 %v414, %v419
        %v421 = vadd.f32 %v415, %v419
        %422 = vst.msk [vmem:[#allocation2] sm:$0xff] %vm382, %v420
        %423 = vst.msk [vmem:[#allocation2 + $0x8] sm:$0xff] %vm382, %v421
      $region60: #{multitask_forward.1} parent=55 // pred_fallthru
        _
      %v424 = vld [vmem:[#allocation2] sm:$0xff]
      %v425 = vld [vmem:[#allocation2 + $0x8] sm:$0xff]
      %v426 = vld [vmem:[%s360] sm:$0xff]
      %v427 = vld [vmem:[%s360 + $0x8] sm:$0xff]
      %v428 = vld [vmem:[%s360 + $0x10] sm:$0xff]
      %v429 = vld [vmem:[%s360 + $0x18] sm:$0xff]
      %v430 = vld [vmem:[%s374] sm:$0xff]
      %v431 = vlaneseq
      %v432 = vshrl.u32 %v431, 7
      %v433 = vsub.s32 0, %v432
      %v434 = vrot.slane %v430, %v433
      %vm435 = vcmask 261120
      %v437 = vsel %vm435, %v424, 0
      %v440 = vsel %vm435, %v425, 0
      %442 = vmatprep.subr.mxu0 0.0
      %443 = vmatpush1.msra.mxu0 %v426
      %444 = vmatprep.subr.mxu0 0.0
      %445 = vmatpush1.msra.mxu0 %v427
      %446 = vmatprep.subr.mxu0 0.0
      %447 = vmatpush1.msra.mxu0 %v428
      %448 = vmatprep.subr.mxu0 0.0
      %449 = vmatpush1.msra.mxu0 %v429
      %450 = vmatprep.subr.mxu0 0.0
      %451 = vmatpush1.msra.mxu0 0.0
      %452 = vmatprep.subr.mxu0 0.0
      %453 = vmatpush1.msra.mxu0 0.0
      %454 = vmatprep.subr.mxu0 0.0
      %455 = vmatpush1.msra.mxu0 0.0
      %456 = vmatprep.subr.mxu0 0.0
      %457 = vmatpush1.msra.mxu0 0.0
      %458 = vmatprep.subr.mxu0 0.0
      %459 = vmatpush1.msra.mxu0 0.0
      %460 = vmatprep.subr.mxu0 0.0
      %461 = vmatpush1.msra.mxu0 0.0
      %462 = vmatprep.subr.mxu0 0.0
      %463 = vmatpush1.msra.mxu0 0.0
      %464 = vmatprep.subr.mxu0 0.0
      %465 = vmatpush1.msra.mxu0 0.0
      %466 = vmatprep.subr.mxu0 0.0
      %467 = vmatpush1.msra.mxu0 0.0
      %468 = vmatprep.subr.mxu0 0.0
      %469 = vmatpush1.msra.mxu0 0.0
      %470 = vmatprep.subr.mxu0 0.0
      %471 = vmatpush1.msra.mxu0 0.0
      %472 = vmatprep.subr.mxu0 0.0
      %473 = vmatpush1.msra.mxu0 0.0
      %474 = vmatprep.subr.mxu0 0.0
      %475 = vmatpush1.msra.mxu0 0.0
      %476 = vmatprep.subr.mxu0 0.0
      %477 = vmatpush1.msra.mxu0 0.0
      %478 = vmatprep.subr.mxu0 0.0
      %479 = vmatpush1.msra.mxu0 0.0
      %480 = vmatprep.subr.mxu0 0.0
      %481 = vmatpush1.msra.mxu0 0.0
      %482 = vmatprep.subr.mxu0 0.0
      %483 = vmatpush1.msra.mxu0 0.0
      %484 = vmatprep.subr.mxu0 0.0
      %485 = vmatpush1.msra.mxu0 0.0
      %486 = vmatprep.subr.mxu0 0.0
      %487 = vmatpush1.msra.mxu0 0.0
      %488 = vmatprep.subr.mxu0 0.0
      %489 = vmatpush1.msra.mxu0 0.0
      %490 = vmatprep.subr.mxu0 0.0
      %491 = vmatpush1.msra.mxu0 0.0
      %492 = vmatprep.subr.mxu0 0.0
      %493 = vmatpush1.msra.mxu0 0.0
      %494 = vmatprep.subr.mxu0 0.0
      %495 = vmatpush1.msra.mxu0 0.0
      %496 = vmatprep.subr.mxu0 0.0
      %497 = vmatpush1.msra.mxu0 0.0
      %498 = vmatprep.subr.mxu0 0.0
      %499 = vmatpush1.msra.mxu0 0.0
      %500 = vmatprep.subr.mxu0 0.0
      %501 = vmatpush1.msra.mxu0 0.0
      %502 = vmatprep.subr.mxu0 0.0
      %503 = vmatpush1.msra.mxu0 0.0
      %504 = vmatprep.subr.mxu0 0.0
      %505 = vmatpush1.msra.mxu0 0.0
      %506 = vmatprep.mubr.f32.mxu0 0.0
      %507 = vmatmul.mubr.f32.gmra.mrb[0].mxu0 %v437
      %v508 = vpop.f32.mrb[0].mxu0
      %v509 = vadd.f32 %v434, %v508
      %v510 = vpop.f32.mrb[0].mxu0
      %511 = vmatprep.mubr.f32.mxu0 0.0
      %512 = vmatmul.mubr.f32.gmra.mrb[0].mxu0 %v440
      %v513 = vpop.f32.mrb[0].mxu0
      %v514 = vadd.f32 %v434, %v513
      %v515 = vpop.f32.mrb[0].mxu0
      %516 = vdwg.mxu0
      %v517 = vld [vmem:[%s2] sm:$0x1]
      %v518 = vld [vmem:[%s2 + $0x1] sm:$0x1]
      %v521 = vlaneseq
      %v522 = vshrl.u32 %v521, 7
      %v523 = vsub.s32 0, %v522
      %v524 = vrot.slane %v517, %v523
      %v525 = vlaneseq
      %v526 = vshrl.u32 %v525, 7
      %v527 = vsub.s32 0, %v526
      %v528 = vrot.slane %v518, %v527
      %532 = vrot.lane.b32.xlu0 %v509, 96
      %v533 = vpop.permute.xlu0 %532
      %vm534 = vcmask 130048
      %v535 = vsel %vm534, %v509, 0
      %v537 = vsel %vm534, %v533, 0
      %539 = vmatprep.subr.mxu0 0.0
      %540 = vmatpush1.xpose.msra.mxu0 %v537
      %541 = vmatprep.subr.mxu0 0.0
      %542 = vmatpush1.xpose.msra.mxu0 0.0
      %543 = vmatprep.subr.mxu0 0.0
      %544 = vmatpush1.xpose.msra.mxu0 0.0
      %545 = vmatprep.subr.mxu0 0.0
      %546 = vmatpush1.xpose.msra.mxu0 0.0
      %547 = vmatprep.subr.mxu0 0.0
      %548 = vmatpush1.xpose.msra.mxu0 0.0
      %549 = vmatprep.subr.mxu0 0.0
      %550 = vmatpush1.xpose.msra.mxu0 0.0
      %551 = vmatprep.subr.mxu0 0.0
      %552 = vmatpush1.xpose.msra.mxu0 0.0
      %553 = vmatprep.subr.mxu0 0.0
      %554 = vmatpush1.xpose.msra.mxu0 0.0
      %555 = vmatprep.subr.mxu0 0.0
      %556 = vmatpush1.xpose.msra.mxu0 0.0
      %557 = vmatprep.subr.mxu0 0.0
      %558 = vmatpush1.xpose.msra.mxu0 0.0
      %559 = vmatprep.subr.mxu0 0.0
      %560 = vmatpush1.xpose.msra.mxu0 0.0
      %561 = vmatprep.subr.mxu0 0.0
      %562 = vmatpush1.xpose.msra.mxu0 0.0
      %563 = vmatprep.subr.mxu0 0.0
      %564 = vmatpush1.xpose.msra.mxu0 0.0
      %565 = vmatprep.subr.mxu0 0.0
      %566 = vmatpush1.xpose.msra.mxu0 0.0
      %567 = vmatprep.subr.mxu0 0.0
      %568 = vmatpush1.xpose.msra.mxu0 0.0
      %569 = vmatprep.subr.mxu0 0.0
      %570 = vmatpush1.xpose.msra.mxu0 0.0
      %571 = vmatprep.subr.mxu0 0.0
      %572 = vmatpush1.xpose.msra.mxu0 0.0
      %573 = vmatprep.subr.mxu0 0.0
      %574 = vmatpush1.xpose.msra.mxu0 0.0
      %575 = vmatprep.subr.mxu0 0.0
      %576 = vmatpush1.xpose.msra.mxu0 0.0
      %577 = vmatprep.subr.mxu0 0.0
      %578 = vmatpush1.xpose.msra.mxu0 0.0
      %579 = vmatprep.subr.mxu0 0.0
      %580 = vmatpush1.xpose.msra.mxu0 0.0
      %581 = vmatprep.subr.mxu0 0.0
      %582 = vmatpush1.xpose.msra.mxu0 0.0
      %583 = vmatprep.subr.mxu0 0.0
      %584 = vmatpush1.xpose.msra.mxu0 0.0
      %585 = vmatprep.subr.mxu0 0.0
      %586 = vmatpush1.xpose.msra.mxu0 0.0
      %587 = vmatprep.subr.mxu0 0.0
      %588 = vmatpush1.xpose.msra.mxu0 0.0
      %589 = vmatprep.subr.mxu0 0.0
      %590 = vmatpush1.xpose.msra.mxu0 0.0
      %591 = vmatprep.subr.mxu0 0.0
      %592 = vmatpush1.xpose.msra.mxu0 0.0
      %593 = vmatprep.subr.mxu0 0.0
      %594 = vmatpush1.xpose.msra.mxu0 0.0
      %595 = vmatprep.subr.mxu0 0.0
      %596 = vmatpush1.xpose.msra.mxu0 0.0
      %597 = vmatprep.subr.mxu0 0.0
      %598 = vmatpush1.xpose.msra.mxu0 0.0
      %599 = vmatprep.subr.mxu0 0.0
      %600 = vmatpush1.xpose.msra.mxu0 0.0
      %601 = vmatprep.subr.mxu0 0.0
      %602 = vmatpush1.xpose.msra.mxu0 0.0
      %603 = vmatprep.mubr.f32.mxu0 0.0
      %604 = vmatmul.mubr.f32.gmra.mrb[0].mxu0 %v535
      %v605 = vpop.f32.mrb[0].mxu0
      %v606 = vadd.f32 %v524, %v605
      %v607 = vpop.f32.mrb[0].mxu0
      %608 = vdwg.mxu0
      %610 = vrot.lane.b32.xlu0 %v514, 96
      %v611 = vpop.permute.xlu0 %610
      %v612 = vsel %vm534, %v514, 0
      %v614 = vsel %vm534, %v611, 0
      %616 = vmatprep.subr.mxu0 0.0
      %617 = vmatpush1.xpose.msra.mxu0 %v614
      %618 = vmatprep.subr.mxu0 0.0
      %619 = vmatpush1.xpose.msra.mxu0 0.0
      %620 = vmatprep.subr.mxu0 0.0
      %621 = vmatpush1.xpose.msra.mxu0 0.0
      %622 = vmatprep.subr.mxu0 0.0
      %623 = vmatpush1.xpose.msra.mxu0 0.0
      %624 = vmatprep.subr.mxu0 0.0
      %625 = vmatpush1.xpose.msra.mxu0 0.0
      %626 = vmatprep.subr.mxu0 0.0
      %627 = vmatpush1.xpose.msra.mxu0 0.0
      %628 = vmatprep.subr.mxu0 0.0
      %629 = vmatpush1.xpose.msra.mxu0 0.0
      %630 = vmatprep.subr.mxu0 0.0
      %631 = vmatpush1.xpose.msra.mxu0 0.0
      %632 = vmatprep.subr.mxu0 0.0
      %633 = vmatpush1.xpose.msra.mxu0 0.0
      %634 = vmatprep.subr.mxu0 0.0
      %635 = vmatpush1.xpose.msra.mxu0 0.0
      %636 = vmatprep.subr.mxu0 0.0
      %637 = vmatpush1.xpose.msra.mxu0 0.0
      %638 = vmatprep.subr.mxu0 0.0
      %639 = vmatpush1.xpose.msra.mxu0 0.0
      %640 = vmatprep.subr.mxu0 0.0
      %641 = vmatpush1.xpose.msra.mxu0 0.0
      %642 = vmatprep.subr.mxu0 0.0
      %643 = vmatpush1.xpose.msra.mxu0 0.0
      %644 = vmatprep.subr.mxu0 0.0
      %645 = vmatpush1.xpose.msra.mxu0 0.0
      %646 = vmatprep.subr.mxu0 0.0
      %647 = vmatpush1.xpose.msra.mxu0 0.0
      %648 = vmatprep.subr.mxu0 0.0
      %649 = vmatpush1.xpose.msra.mxu0 0.0
      %650 = vmatprep.subr.mxu0 0.0
      %651 = vmatpush1.xpose.msra.mxu0 0.0
      %652 = vmatprep.subr.mxu0 0.0
      %653 = vmatpush1.xpose.msra.mxu0 0.0
      %654 = vmatprep.subr.mxu0 0.0
      %655 = vmatpush1.xpose.msra.mxu0 0.0
      %656 = vmatprep.subr.mxu0 0.0
      %657 = vmatpush1.xpose.msra.mxu0 0.0
      %658 = vmatprep.subr.mxu0 0.0
      %659 = vmatpush1.xpose.msra.mxu0 0.0
      %660 = vmatprep.subr.mxu0 0.0
      %661 = vmatpush1.xpose.msra.mxu0 0.0
      %662 = vmatprep.subr.mxu0 0.0
      %663 = vmatpush1.xpose.msra.mxu0 0.0
      %664 = vmatprep.subr.mxu0 0.0
      %665 = vmatpush1.xpose.msra.mxu0 0.0
      %666 = vmatprep.subr.mxu0 0.0
      %667 = vmatpush1.xpose.msra.mxu0 0.0
      %668 = vmatprep.subr.mxu0 0.0
      %669 = vmatpush1.xpose.msra.mxu0 0.0
      %670 = vmatprep.subr.mxu0 0.0
      %671 = vmatpush1.xpose.msra.mxu0 0.0
      %672 = vmatprep.subr.mxu0 0.0
      %673 = vmatpush1.xpose.msra.mxu0 0.0
      %674 = vmatprep.subr.mxu0 0.0
      %675 = vmatpush1.xpose.msra.mxu0 0.0
      %676 = vmatprep.subr.mxu0 0.0
      %677 = vmatpush1.xpose.msra.mxu0 0.0
      %678 = vmatprep.subr.mxu0 0.0
      %679 = vmatpush1.xpose.msra.mxu0 0.0
      %680 = vmatprep.mubr.f32.mxu0 0.0
      %681 = vmatmul.mubr.f32.gmra.mrb[0].mxu0 %v612
      %v682 = vpop.f32.mrb[0].mxu0
      %v683 = vadd.f32 %v528, %v682
      %v684 = vpop.f32.mrb[0].mxu0
      %685 = vdwg.mxu0
      %vm686 = vcmask 64512
      %v687 = vsel %vm686, %v606, -inf
      %688 = vmax.xlane.f32.xlu0 %v687
      %v689 = vpop.xlane.xlu0 %688
      %v690 = vsel %vm686, %v683, -inf
      %691 = vmax.xlane.f32.xlu0 %v690
      %v692 = vpop.xlane.xlu0 %691
      %v693 = vsub.f32 %v606, %v689
      %v694 = vsub.f32 %v683, %v692
      %v695 = vmul.f32 %v693, 1.442695
      %v696 = vpow.pop %v695
      %v697 = vmul.f32 %v694, 1.442695
      %v698 = vpow.pop %v697
      %v699 = vsel %vm686, %v696, 0.0
      %700 = vadd.xlane.f32.xlu0 %v699
      %v701 = vpop.xlane.xlu0 %700
      %v702 = vsel %vm686, %v698, 0.0
      %703 = vadd.xlane.f32.xlu0 %v702
      %v704 = vpop.xlane.xlu0 %703
      %v705 = vrcp.pop %v701
      %v706 = vrcp.pop %v704
      %v707 = vmul.f32 %v696, %v705
      %v708 = vmul.f32 %v698, %v706
      %709 = vrot.lane.b32.xlu0 %v509, 64
      %v710 = vpop.permute.xlu0 %709
      %v713 = vsel %vm686, %v707, 0
      %715 = vmatprep.subr.mxu0 0.0
      %716 = vmatpush1.msra.mxu0 %v710
      %717 = vmatprep.subr.mxu0 0.0
      %718 = vmatpush1.msra.mxu0 0.0
      %719 = vmatprep.subr.mxu0 0.0
      %720 = vmatpush1.msra.mxu0 0.0
      %721 = vmatprep.subr.mxu0 0.0
      %722 = vmatpush1.msra.mxu0 0.0
      %723 = vmatprep.subr.mxu0 0.0
      %724 = vmatpush1.msra.mxu0 0.0
      %725 = vmatprep.subr.mxu0 0.0
      %726 = vmatpush1.msra.mxu0 0.0
      %727 = vmatprep.subr.mxu0 0.0
      %728 = vmatpush1.msra.mxu0 0.0
      %729 = vmatprep.subr.mxu0 0.0
      %730 = vmatpush1.msra.mxu0 0.0
      %731 = vmatprep.subr.mxu0 0.0
      %732 = vmatpush1.msra.mxu0 0.0
      %733 = vmatprep.subr.mxu0 0.0
      %734 = vmatpush1.msra.mxu0 0.0
      %735 = vmatprep.subr.mxu0 0.0
      %736 = vmatpush1.msra.mxu0 0.0
      %737 = vmatprep.subr.mxu0 0.0
      %738 = vmatpush1.msra.mxu0 0.0
      %739 = vmatprep.subr.mxu0 0.0
      %740 = vmatpush1.msra.mxu0 0.0
      %741 = vmatprep.subr.mxu0 0.0
      %742 = vmatpush1.msra.mxu0 0.0
      %743 = vmatprep.subr.mxu0 0.0
      %744 = vmatpush1.msra.mxu0 0.0
      %745 = vmatprep.subr.mxu0 0.0
      %746 = vmatpush1.msra.mxu0 0.0
      %747 = vmatprep.subr.mxu0 0.0
      %748 = vmatpush1.msra.mxu0 0.0
      %749 = vmatprep.subr.mxu0 0.0
      %750 = vmatpush1.msra.mxu0 0.0
      %751 = vmatprep.subr.mxu0 0.0
      %752 = vmatpush1.msra.mxu0 0.0
      %753 = vmatprep.subr.mxu0 0.0
      %754 = vmatpush1.msra.mxu0 0.0
      %755 = vmatprep.subr.mxu0 0.0
      %756 = vmatpush1.msra.mxu0 0.0
      %757 = vmatprep.subr.mxu0 0.0
      %758 = vmatpush1.msra.mxu0 0.0
      %759 = vmatprep.subr.mxu0 0.0
      %760 = vmatpush1.msra.mxu0 0.0
      %761 = vmatprep.subr.mxu0 0.0
      %762 = vmatpush1.msra.mxu0 0.0
      %763 = vmatprep.subr.mxu0 0.0
      %764 = vmatpush1.msra.mxu0 0.0
      %765 = vmatprep.subr.mxu0 0.0
      %766 = vmatpush1.msra.mxu0 0.0
      %767 = vmatprep.subr.mxu0 0.0
      %768 = vmatpush1.msra.mxu0 0.0
      %769 = vmatprep.subr.mxu0 0.0
      %770 = vmatpush1.msra.mxu0 0.0
      %771 = vmatprep.subr.mxu0 0.0
      %772 = vmatpush1.msra.mxu0 0.0
      %773 = vmatprep.subr.mxu0 0.0
      %774 = vmatpush1.msra.mxu0 0.0
      %775 = vmatprep.subr.mxu0 0.0
      %776 = vmatpush1.msra.mxu0 0.0
      %777 = vmatprep.subr.mxu0 0.0
      %778 = vmatpush1.msra.mxu0 0.0
      %779 = vmatprep.mubr.f32.mxu0 0.0
      %780 = vmatmul.mubr.f32.gmra.mrb[0].mxu0 %v713
      %v781 = vpop.f32.mrb[0].mxu0
      %v782 = vadd.f32 0.0, %v781
      %v783 = vpop.f32.mrb[0].mxu0
      %784 = vdwg.mxu0
      %785 = vrot.lane.b32.xlu0 %v514, 64
      %v786 = vpop.permute.xlu0 %785
      %v789 = vsel %vm686, %v708, 0
      %791 = vmatprep.subr.mxu0 0.0
      %792 = vmatpush1.msra.mxu0 %v786
      %793 = vmatprep.subr.mxu0 0.0
      %794 = vmatpush1.msra.mxu0 0.0
      %795 = vmatprep.subr.mxu0 0.0
      %796 = vmatpush1.msra.mxu0 0.0
      %797 = vmatprep.subr.mxu0 0.0
      %798 = vmatpush1.msra.mxu0 0.0
      %799 = vmatprep.subr.mxu0 0.0
      %800 = vmatpush1.msra.mxu0 0.0
      %801 = vmatprep.subr.mxu0 0.0
      %802 = vmatpush1.msra.mxu0 0.0
      %803 = vmatprep.subr.mxu0 0.0
      %804 = vmatpush1.msra.mxu0 0.0
      %805 = vmatprep.subr.mxu0 0.0
      %806 = vmatpush1.msra.mxu0 0.0
      %807 = vmatprep.subr.mxu0 0.0
      %808 = vmatpush1.msra.mxu0 0.0
      %809 = vmatprep.subr.mxu0 0.0
      %810 = vmatpush1.msra.mxu0 0.0
      %811 = vmatprep.subr.mxu0 0.0
      %812 = vmatpush1.msra.mxu0 0.0
      %813 = vmatprep.subr.mxu0 0.0
      %814 = vmatpush1.msra.mxu0 0.0
      %815 = vmatprep.subr.mxu0 0.0
      %816 = vmatpush1.msra.mxu0 0.0
      %817 = vmatprep.subr.mxu0 0.0
      %818 = vmatpush1.msra.mxu0 0.0
      %819 = vmatprep.subr.mxu0 0.0
      %820 = vmatpush1.msra.mxu0 0.0
      %821 = vmatprep.subr.mxu0 0.0
      %822 = vmatpush1.msra.mxu0 0.0
      %823 = vmatprep.subr.mxu0 0.0
      %824 = vmatpush1.msra.mxu0 0.0
      %825 = vmatprep.subr.mxu0 0.0
      %826 = vmatpush1.msra.mxu0 0.0
      %827 = vmatprep.subr.mxu0 0.0
      %828 = vmatpush1.msra.mxu0 0.0
      %829 = vmatprep.subr.mxu0 0.0
      %830 = vmatpush1.msra.mxu0 0.0
      %831 = vmatprep.subr.mxu0 0.0
      %832 = vmatpush1.msra.mxu0 0.0
      %833 = vmatprep.subr.mxu0 0.0
      %834 = vmatpush1.msra.mxu0 0.0
      %835 = vmatprep.subr.mxu0 0.0
      %836 = vmatpush1.msra.mxu0 0.0
      %837 = vmatprep.subr.mxu0 0.0
      %838 = vmatpush1.msra.mxu0 0.0
      %839 = vmatprep.subr.mxu0 0.0
      %840 = vmatpush1.msra.mxu0 0.0
      %841 = vmatprep.subr.mxu0 0.0
      %842 = vmatpush1.msra.mxu0 0.0
      %843 = vmatprep.subr.mxu0 0.0
      %844 = vmatpush1.msra.mxu0 0.0
      %845 = vmatprep.subr.mxu0 0.0
      %846 = vmatpush1.msra.mxu0 0.0
      %847 = vmatprep.subr.mxu0 0.0
      %848 = vmatpush1.msra.mxu0 0.0
      %849 = vmatprep.subr.mxu0 0.0
      %850 = vmatpush1.msra.mxu0 0.0
      %851 = vmatprep.subr.mxu0 0.0
      %852 = vmatpush1.msra.mxu0 0.0
      %853 = vmatprep.subr.mxu0 0.0
      %854 = vmatpush1.msra.mxu0 0.0
      %855 = vmatprep.mubr.f32.mxu0 0.0
      %856 = vmatmul.mubr.f32.gmra.mrb[0].mxu0 %v789
      %v857 = vpop.f32.mrb[0].mxu0
      %v858 = vadd.f32 0.0, %v857
      %v859 = vpop.f32.mrb[0].mxu0
      %860 = vdwg.mxu0
      %861 = vrot.lane.b32.xlu0 %v509, 112
      %v862 = vpop.permute.xlu0 %861
      %863 = vrot.lane.b32.xlu0 %v509, 80
      %v864 = vpop.permute.xlu0 %863
      %v865 = vsel %vm534, %v862, 0
      %v867 = vsel %vm534, %v864, 0
      %869 = vmatprep.subr.mxu0 0.0
      %870 = vmatpush1.xpose.msra.mxu0 %v867
      %871 = vmatprep.subr.mxu0 0.0
      %872 = vmatpush1.xpose.msra.mxu0 0.0
      %873 = vmatprep.subr.mxu0 0.0
      %874 = vmatpush1.xpose.msra.mxu0 0.0
      %875 = vmatprep.subr.mxu0 0.0
      %876 = vmatpush1.xpose.msra.mxu0 0.0
      %877 = vmatprep.subr.mxu0 0.0
      %878 = vmatpush1.xpose.msra.mxu0 0.0
      %879 = vmatprep.subr.mxu0 0.0
      %880 = vmatpush1.xpose.msra.mxu0 0.0
      %881 = vmatprep.subr.mxu0 0.0
      %882 = vmatpush1.xpose.msra.mxu0 0.0
      %883 = vmatprep.subr.mxu0 0.0
      %884 = vmatpush1.xpose.msra.mxu0 0.0
      %885 = vmatprep.subr.mxu0 0.0
      %886 = vmatpush1.xpose.msra.mxu0 0.0
      %887 = vmatprep.subr.mxu0 0.0
      %888 = vmatpush1.xpose.msra.mxu0 0.0
      %889 = vmatprep.subr.mxu0 0.0
      %890 = vmatpush1.xpose.msra.mxu0 0.0
      %891 = vmatprep.subr.mxu0 0.0
      %892 = vmatpush1.xpose.msra.mxu0 0.0
      %893 = vmatprep.subr.mxu0 0.0
      %894 = vmatpush1.xpose.msra.mxu0 0.0
      %895 = vmatprep.subr.mxu0 0.0
      %896 = vmatpush1.xpose.msra.mxu0 0.0
      %897 = vmatprep.subr.mxu0 0.0
      %898 = vmatpush1.xpose.msra.mxu0 0.0
      %899 = vmatprep.subr.mxu0 0.0
      %900 = vmatpush1.xpose.msra.mxu0 0.0
      %901 = vmatprep.subr.mxu0 0.0
      %902 = vmatpush1.xpose.msra.mxu0 0.0
      %903 = vmatprep.subr.mxu0 0.0
      %904 = vmatpush1.xpose.msra.mxu0 0.0
      %905 = vmatprep.subr.mxu0 0.0
      %906 = vmatpush1.xpose.msra.mxu0 0.0
      %907 = vmatprep.subr.mxu0 0.0
      %908 = vmatpush1.xpose.msra.mxu0 0.0
      %909 = vmatprep.subr.mxu0 0.0
      %910 = vmatpush1.xpose.msra.mxu0 0.0
      %911 = vmatprep.subr.mxu0 0.0
      %912 = vmatpush1.xpose.msra.mxu0 0.0
      %913 = vmatprep.subr.mxu0 0.0
      %914 = vmatpush1.xpose.msra.mxu0 0.0
      %915 = vmatprep.subr.mxu0 0.0
      %916 = vmatpush1.xpose.msra.mxu0 0.0
      %917 = vmatprep.subr.mxu0 0.0
      %918 = vmatpush1.xpose.msra.mxu0 0.0
      %919 = vmatprep.subr.mxu0 0.0
      %920 = vmatpush1.xpose.msra.mxu0 0.0
      %921 = vmatprep.subr.mxu0 0.0
      %922 = vmatpush1.xpose.msra.mxu0 0.0
      %923 = vmatprep.subr.mxu0 0.0
      %924 = vmatpush1.xpose.msra.mxu0 0.0
      %925 = vmatprep.subr.mxu0 0.0
      %926 = vmatpush1.xpose.msra.mxu0 0.0
      %927 = vmatprep.subr.mxu0 0.0
      %928 = vmatpush1.xpose.msra.mxu0 0.0
      %929 = vmatprep.subr.mxu0 0.0
      %930 = vmatpush1.xpose.msra.mxu0 0.0
      %931 = vmatprep.subr.mxu0 0.0
      %932 = vmatpush1.xpose.msra.mxu0 0.0
      %933 = vmatprep.mubr.f32.mxu0 0.0
      %934 = vmatmul.mubr.f32.gmra.mrb[0].mxu0 %v865
      %v935 = vpop.f32.mrb[0].mxu0
      %v936 = vadd.f32 %v524, %v935
      %v937 = vpop.f32.mrb[0].mxu0
      %938 = vdwg.mxu0
      %939 = vrot.lane.b32.xlu0 %v514, 112
      %v940 = vpop.permute.xlu0 %939
      %941 = vrot.lane.b32.xlu0 %v514, 80
      %v942 = vpop.permute.xlu0 %941
      %v943 = vsel %vm534, %v940, 0
      %v945 = vsel %vm534, %v942, 0
      %947 = vmatprep.subr.mxu0 0.0
      %948 = vmatpush1.xpose.msra.mxu0 %v945
      %949 = vmatprep.subr.mxu0 0.0
      %950 = vmatpush1.xpose.msra.mxu0 0.0
      %951 = vmatprep.subr.mxu0 0.0
      %952 = vmatpush1.xpose.msra.mxu0 0.0
      %953 = vmatprep.subr.mxu0 0.0
      %954 = vmatpush1.xpose.msra.mxu0 0.0
      %955 = vmatprep.subr.mxu0 0.0
      %956 = vmatpush1.xpose.msra.mxu0 0.0
      %957 = vmatprep.subr.mxu0 0.0
      %958 = vmatpush1.xpose.msra.mxu0 0.0
      %959 = vmatprep.subr.mxu0 0.0
      %960 = vmatpush1.xpose.msra.mxu0 0.0
      %961 = vmatprep.subr.mxu0 0.0
      %962 = vmatpush1.xpose.msra.mxu0 0.0
      %963 = vmatprep.subr.mxu0 0.0
      %964 = vmatpush1.xpose.msra.mxu0 0.0
      %965 = vmatprep.subr.mxu0 0.0
      %966 = vmatpush1.xpose.msra.mxu0 0.0
      %967 = vmatprep.subr.mxu0 0.0
      %968 = vmatpush1.xpose.msra.mxu0 0.0
      %969 = vmatprep.subr.mxu0 0.0
      %970 = vmatpush1.xpose.msra.mxu0 0.0
      %971 = vmatprep.subr.mxu0 0.0
      %972 = vmatpush1.xpose.msra.mxu0 0.0
      %973 = vmatprep.subr.mxu0 0.0
      %974 = vmatpush1.xpose.msra.mxu0 0.0
      %975 = vmatprep.subr.mxu0 0.0
      %976 = vmatpush1.xpose.msra.mxu0 0.0
      %977 = vmatprep.subr.mxu0 0.0
      %978 = vmatpush1.xpose.msra.mxu0 0.0
      %979 = vmatprep.subr.mxu0 0.0
      %980 = vmatpush1.xpose.msra.mxu0 0.0
      %981 = vmatprep.subr.mxu0 0.0
      %982 = vmatpush1.xpose.msra.mxu0 0.0
      %983 = vmatprep.subr.mxu0 0.0
      %984 = vmatpush1.xpose.msra.mxu0 0.0
      %985 = vmatprep.subr.mxu0 0.0
      %986 = vmatpush1.xpose.msra.mxu0 0.0
      %987 = vmatprep.subr.mxu0 0.0
      %988 = vmatpush1.xpose.msra.mxu0 0.0
      %989 = vmatprep.subr.mxu0 0.0
      %990 = vmatpush1.xpose.msra.mxu0 0.0
      %991 = vmatprep.subr.mxu0 0.0
      %992 = vmatpush1.xpose.msra.mxu0 0.0
      %993 = vmatprep.subr.mxu0 0.0
      %994 = vmatpush1.xpose.msra.mxu0 0.0
      %995 = vmatprep.subr.mxu0 0.0
      %996 = vmatpush1.xpose.msra.mxu0 0.0
      %997 = vmatprep.subr.mxu0 0.0
      %998 = vmatpush1.xpose.msra.mxu0 0.0
      %999 = vmatprep.subr.mxu0 0.0
      %1000 = vmatpush1.xpose.msra.mxu0 0.0
      %1001 = vmatprep.subr.mxu0 0.0
      %1002 = vmatpush1.xpose.msra.mxu0 0.0
      %1003 = vmatprep.subr.mxu0 0.0
      %1004 = vmatpush1.xpose.msra.mxu0 0.0
      %1005 = vmatprep.subr.mxu0 0.0
      %1006 = vmatpush1.xpose.msra.mxu0 0.0
      %1007 = vmatprep.subr.mxu0 0.0
      %1008 = vmatpush1.xpose.msra.mxu0 0.0
      %1009 = vmatprep.subr.mxu0 0.0
      %1010 = vmatpush1.xpose.msra.mxu0 0.0
      %1011 = vmatprep.mubr.f32.mxu0 0.0
      %1012 = vmatmul.mubr.f32.gmra.mrb[0].mxu0 %v943
      %v1013 = vpop.f32.mrb[0].mxu0
      %v1014 = vadd.f32 %v528, %v1013
      %v1015 = vpop.f32.mrb[0].mxu0
      %1016 = vdwg.mxu0
      %v1017 = vsel %vm686, %v936, -inf
      %1018 = vmax.xlane.f32.xlu0 %v1017
      %v1019 = vpop.xlane.xlu0 %1018
      %v1020 = vsel %vm686, %v1014, -inf
      %1021 = vmax.xlane.f32.xlu0 %v1020
      %v1022 = vpop.xlane.xlu0 %1021
      %v1023 = vsub.f32 %v936, %v1019
      %v1024 = vsub.f32 %v1014, %v1022
      %v1025 = vmul.f32 %v1023, 1.442695
      %v1026 = vpow.pop %v1025
      %v1027 = vmul.f32 %v1024, 1.442695
      %v1028 = vpow.pop %v1027
      %v1029 = vsel %vm686, %v1026, 0.0
      %1030 = vadd.xlane.f32.xlu0 %v1029
      %v1031 = vpop.xlane.xlu0 %1030
      %v1032 = vsel %vm686, %v1028, 0.0
      %1033 = vadd.xlane.f32.xlu0 %v1032
      %v1034 = vpop.xlane.xlu0 %1033
      %v1035 = vrcp.pop %v1031
      %v1036 = vrcp.pop %v1034
      %v1037 = vmul.f32 %v1026, %v1035
      %v1038 = vmul.f32 %v1028, %v1036
      %1039 = vrot.lane.b32.xlu0 %v509, 48
      %v1040 = vpop.permute.xlu0 %1039
      %v1043 = vsel %vm686, %v1037, 0
      %1045 = vmatprep.subr.mxu0 0.0
      %1046 = vmatpush1.msra.mxu0 %v1040
      %1047 = vmatprep.subr.mxu0 0.0
      %1048 = vmatpush1.msra.mxu0 0.0
      %1049 = vmatprep.subr.mxu0 0.0
      %1050 = vmatpush1.msra.mxu0 0.0
      %1051 = vmatprep.subr.mxu0 0.0
      %1052 = vmatpush1.msra.mxu0 0.0
      %1053 = vmatprep.subr.mxu0 0.0
      %1054 = vmatpush1.msra.mxu0 0.0
      %1055 = vmatprep.subr.mxu0 0.0
      %1056 = vmatpush1.msra.mxu0 0.0
      %1057 = vmatprep.subr.mxu0 0.0
      %1058 = vmatpush1.msra.mxu0 0.0
      %1059 = vmatprep.subr.mxu0 0.0
      %1060 = vmatpush1.msra.mxu0 0.0
      %1061 = vmatprep.subr.mxu0 0.0
      %1062 = vmatpush1.msra.mxu0 0.0
      %1063 = vmatprep.subr.mxu0 0.0
      %1064 = vmatpush1.msra.mxu0 0.0
      %1065 = vmatprep.subr.mxu0 0.0
      %1066 = vmatpush1.msra.mxu0 0.0
      %1067 = vmatprep.subr.mxu0 0.0
      %1068 = vmatpush1.msra.mxu0 0.0
      %1069 = vmatprep.subr.mxu0 0.0
      %1070 = vmatpush1.msra.mxu0 0.0
      %1071 = vmatprep.subr.mxu0 0.0
      %1072 = vmatpush1.msra.mxu0 0.0
      %1073 = vmatprep.subr.mxu0 0.0
      %1074 = vmatpush1.msra.mxu0 0.0
      %1075 = vmatprep.subr.mxu0 0.0
      %1076 = vmatpush1.msra.mxu0 0.0
      %1077 = vmatprep.subr.mxu0 0.0
      %1078 = vmatpush1.msra.mxu0 0.0
      %1079 = vmatprep.subr.mxu0 0.0
      %1080 = vmatpush1.msra.mxu0 0.0
      %1081 = vmatprep.subr.mxu0 0.0
      %1082 = vmatpush1.msra.mxu0 0.0
      %1083 = vmatprep.subr.mxu0 0.0
      %1084 = vmatpush1.msra.mxu0 0.0
      %1085 = vmatprep.subr.mxu0 0.0
      %1086 = vmatpush1.msra.mxu0 0.0
      %1087 = vmatprep.subr.mxu0 0.0
      %1088 = vmatpush1.msra.mxu0 0.0
      %1089 = vmatprep.subr.mxu0 0.0
      %1090 = vmatpush1.msra.mxu0 0.0
      %1091 = vmatprep.subr.mxu0 0.0
      %1092 = vmatpush1.msra.mxu0 0.0
      %1093 = vmatprep.subr.mxu0 0.0
      %1094 = vmatpush1.msra.mxu0 0.0
      %1095 = vmatprep.subr.mxu0 0.0
      %1096 = vmatpush1.msra.mxu0 0.0
      %1097 = vmatprep.subr.mxu0 0.0
      %1098 = vmatpush1.msra.mxu0 0.0
      %1099 = vmatprep.subr.mxu0 0.0
      %1100 = vmatpush1.msra.mxu0 0.0
      %1101 = vmatprep.subr.mxu0 0.0
      %1102 = vmatpush1.msra.mxu0 0.0
      %1103 = vmatprep.subr.mxu0 0.0
      %1104 = vmatpush1.msra.mxu0 0.0
      %1105 = vmatprep.subr.mxu0 0.0
      %1106 = vmatpush1.msra.mxu0 0.0
      %1107 = vmatprep.subr.mxu0 0.0
      %1108 = vmatpush1.msra.mxu0 0.0
      %1109 = vmatprep.mubr.f32.mxu0 0.0
      %1110 = vmatmul.mubr.f32.gmra.mrb[0].mxu0 %v1043
      %v1111 = vpop.f32.mrb[0].mxu0
      %v1112 = vadd.f32 0.0, %v1111
      %v1113 = vpop.f32.mrb[0].mxu0
      %1114 = vdwg.mxu0
      %1115 = vrot.lane.b32.xlu0 %v514, 48
      %v1116 = vpop.permute.xlu0 %1115
      %v1119 = vsel %vm686, %v1038, 0
      %1121 = vmatprep.subr.mxu0 0.0
      %1122 = vmatpush1.msra.mxu0 %v1116
      %1123 = vmatprep.subr.mxu0 0.0
      %1124 = vmatpush1.msra.mxu0 0.0
      %1125 = vmatprep.subr.mxu0 0.0
      %1126 = vmatpush1.msra.mxu0 0.0
      %1127 = vmatprep.subr.mxu0 0.0
      %1128 = vmatpush1.msra.mxu0 0.0
      %1129 = vmatprep.subr.mxu0 0.0
      %1130 = vmatpush1.msra.mxu0 0.0
      %1131 = vmatprep.subr.mxu0 0.0
      %1132 = vmatpush1.msra.mxu0 0.0
      %1133 = vmatprep.subr.mxu0 0.0
      %1134 = vmatpush1.msra.mxu0 0.0
      %1135 = vmatprep.subr.mxu0 0.0
      %1136 = vmatpush1.msra.mxu0 0.0
      %1137 = vmatprep.subr.mxu0 0.0
      %1138 = vmatpush1.msra.mxu0 0.0
      %1139 = vmatprep.subr.mxu0 0.0
      %1140 = vmatpush1.msra.mxu0 0.0
      %1141 = vmatprep.subr.mxu0 0.0
      %1142 = vmatpush1.msra.mxu0 0.0
      %1143 = vmatprep.subr.mxu0 0.0
      %1144 = vmatpush1.msra.mxu0 0.0
      %1145 = vmatprep.subr.mxu0 0.0
      %1146 = vmatpush1.msra.mxu0 0.0
      %1147 = vmatprep.subr.mxu0 0.0
      %1148 = vmatpush1.msra.mxu0 0.0
      %1149 = vmatprep.subr.mxu0 0.0
      %1150 = vmatpush1.msra.mxu0 0.0
      %1151 = vmatprep.subr.mxu0 0.0
      %1152 = vmatpush1.msra.mxu0 0.0
      %1153 = vmatprep.subr.mxu0 0.0
      %1154 = vmatpush1.msra.mxu0 0.0
      %1155 = vmatprep.subr.mxu0 0.0
      %1156 = vmatpush1.msra.mxu0 0.0
      %1157 = vmatprep.subr.mxu0 0.0
      %1158 = vmatpush1.msra.mxu0 0.0
      %1159 = vmatprep.subr.mxu0 0.0
      %1160 = vmatpush1.msra.mxu0 0.0
      %1161 = vmatprep.subr.mxu0 0.0
      %1162 = vmatpush1.msra.mxu0 0.0
      %1163 = vmatprep.subr.mxu0 0.0
      %1164 = vmatpush1.msra.mxu0 0.0
      %1165 = vmatprep.subr.mxu0 0.0
      %1166 = vmatpush1.msra.mxu0 0.0
      %1167 = vmatprep.subr.mxu0 0.0
      %1168 = vmatpush1.msra.mxu0 0.0
      %1169 = vmatprep.subr.mxu0 0.0
      %1170 = vmatpush1.msra.mxu0 0.0
      %1171 = vmatprep.subr.mxu0 0.0
      %1172 = vmatpush1.msra.mxu0 0.0
      %1173 = vmatprep.subr.mxu0 0.0
      %1174 = vmatpush1.msra.mxu0 0.0
      %1175 = vmatprep.subr.mxu0 0.0
      %1176 = vmatpush1.msra.mxu0 0.0
      %1177 = vmatprep.subr.mxu0 0.0
      %1178 = vmatpush1.msra.mxu0 0.0
      %1179 = vmatprep.subr.mxu0 0.0
      %1180 = vmatpush1.msra.mxu0 0.0
      %1181 = vmatprep.subr.mxu0 0.0
      %1182 = vmatpush1.msra.mxu0 0.0
      %1183 = vmatprep.subr.mxu0 0.0
      %1184 = vmatpush1.msra.mxu0 0.0
      %1185 = vmatprep.mubr.f32.mxu0 0.0
      %1186 = vmatmul.mubr.f32.gmra.mrb[0].mxu0 %v1119
      %v1187 = vpop.f32.mrb[0].mxu0
      %v1188 = vadd.f32 0.0, %v1187
      %v1189 = vpop.f32.mrb[0].mxu0
      %1190 = vdwg.mxu0
      %1193 = vrot.lane.b32.xlu0 %v428, 32
      %v1194 = vpop.permute.xlu0 %1193
      %1195 = vrot.lane.b32.xlu0 %v429, 32
      %v1196 = vpop.permute.xlu0 %1195
      %v1200 = vsel %vm534, %v1112, 0
      %v1203 = vsel %vm534, %v1188, 0
      %1205 = vmatprep.subr.mxu0 0.0
      %1206 = vmatpush1.msra.mxu0 %v1194
      %1207 = vmatprep.subr.mxu0 0.0
      %1208 = vmatpush1.msra.mxu0 %v1196
      %1209 = vmatprep.subr.mxu0 0.0
      %1210 = vmatpush1.msra.mxu0 0.0
      %1211 = vmatprep.subr.mxu0 0.0
      %1212 = vmatpush1.msra.mxu0 0.0
      %1213 = vmatprep.subr.mxu0 0.0
      %1214 = vmatpush1.msra.mxu0 0.0
      %1215 = vmatprep.subr.mxu0 0.0
      %1216 = vmatpush1.msra.mxu0 0.0
      %1217 = vmatprep.subr.mxu0 0.0
      %1218 = vmatpush1.msra.mxu0 0.0
      %1219 = vmatprep.subr.mxu0 0.0
      %1220 = vmatpush1.msra.mxu0 0.0
      %1221 = vmatprep.subr.mxu0 0.0
      %1222 = vmatpush1.msra.mxu0 0.0
      %1223 = vmatprep.subr.mxu0 0.0
      %1224 = vmatpush1.msra.mxu0 0.0
      %1225 = vmatprep.subr.mxu0 0.0
      %1226 = vmatpush1.msra.mxu0 0.0
      %1227 = vmatprep.subr.mxu0 0.0
      %1228 = vmatpush1.msra.mxu0 0.0
      %1229 = vmatprep.subr.mxu0 0.0
      %1230 = vmatpush1.msra.mxu0 0.0
      %1231 = vmatprep.subr.mxu0 0.0
      %1232 = vmatpush1.msra.mxu0 0.0
      %1233 = vmatprep.subr.mxu0 0.0
      %1234 = vmatpush1.msra.mxu0 0.0
      %1235 = vmatprep.subr.mxu0 0.0
      %1236 = vmatpush1.msra.mxu0 0.0
      %1237 = vmatprep.subr.mxu0 0.0
      %1238 = vmatpush1.msra.mxu0 0.0
      %1239 = vmatprep.subr.mxu0 0.0
      %1240 = vmatpush1.msra.mxu0 0.0
      %1241 = vmatprep.subr.mxu0 0.0
      %1242 = vmatpush1.msra.mxu0 0.0
      %1243 = vmatprep.subr.mxu0 0.0
      %1244 = vmatpush1.msra.mxu0 0.0
      %1245 = vmatprep.subr.mxu0 0.0
      %1246 = vmatpush1.msra.mxu0 0.0
      %1247 = vmatprep.subr.mxu0 0.0
      %1248 = vmatpush1.msra.mxu0 0.0
      %1249 = vmatprep.subr.mxu0 0.0
      %1250 = vmatpush1.msra.mxu0 0.0
      %1251 = vmatprep.subr.mxu0 0.0
      %1252 = vmatpush1.msra.mxu0 0.0
      %1253 = vmatprep.subr.mxu0 0.0
      %1254 = vmatpush1.msra.mxu0 0.0
      %1255 = vmatprep.subr.mxu0 0.0
      %1256 = vmatpush1.msra.mxu0 0.0
      %1257 = vmatprep.subr.mxu0 0.0
      %1258 = vmatpush1.msra.mxu0 0.0
      %1259 = vmatprep.subr.mxu0 0.0
      %1260 = vmatpush1.msra.mxu0 0.0
      %1261 = vmatprep.subr.mxu0 0.0
      %1262 = vmatpush1.msra.mxu0 0.0
      %1263 = vmatprep.subr.mxu0 0.0
      %1264 = vmatpush1.msra.mxu0 0.0
      %1265 = vmatprep.subr.mxu0 0.0
      %1266 = vmatpush1.msra.mxu0 0.0
      %1267 = vmatprep.subr.mxu0 0.0
      %1268 = vmatpush1.msra.mxu0 0.0
      %1269 = vmatprep.mubr.f32.mxu0 0.0
      %1270 = vmatmul.mubr.f32.gmra.mrb[0].mxu0 %v1200
      %v1271 = vpop.f32.mrb[0].mxu0
      %v1272 = vadd.f32 0.0, %v1271
      %v1273 = vpop.f32.mrb[0].mxu0
      %1274 = vmatprep.mubr.f32.mxu0 0.0
      %1275 = vmatmul.mubr.f32.gmra.mrb[0].mxu0 %v1203
      %v1276 = vpop.f32.mrb[0].mxu0
      %v1277 = vadd.f32 0.0, %v1276
      %v1278 = vpop.f32.mrb[0].mxu0
      %1279 = vdwg.mxu0
      %1282 = vrot.lane.b32.xlu0 %v426, 32
      %v1283 = vpop.permute.xlu0 %1282
      %1284 = vrot.lane.b32.xlu0 %v427, 32
      %v1285 = vpop.permute.xlu0 %1284
      %v1289 = vsel %vm534, %v782, 0
      %v1292 = vsel %vm534, %v858, 0
      %1294 = vmatprep.subr.mxu0 0.0
      %1295 = vmatpush1.msra.mxu0 %v1283
      %1296 = vmatprep.subr.mxu0 0.0
      %1297 = vmatpush1.msra.mxu0 %v1285
      %1298 = vmatprep.subr.mxu0 0.0
      %1299 = vmatpush1.msra.mxu0 0.0
      %1300 = vmatprep.subr.mxu0 0.0
      %1301 = vmatpush1.msra.mxu0 0.0
      %1302 = vmatprep.subr.mxu0 0.0
      %1303 = vmatpush1.msra.mxu0 0.0
      %1304 = vmatprep.subr.mxu0 0.0
      %1305 = vmatpush1.msra.mxu0 0.0
      %1306 = vmatprep.subr.mxu0 0.0
      %1307 = vmatpush1.msra.mxu0 0.0
      %1308 = vmatprep.subr.mxu0 0.0
      %1309 = vmatpush1.msra.mxu0 0.0
      %1310 = vmatprep.subr.mxu0 0.0
      %1311 = vmatpush1.msra.mxu0 0.0
      %1312 = vmatprep.subr.mxu0 0.0
      %1313 = vmatpush1.msra.mxu0 0.0
      %1314 = vmatprep.subr.mxu0 0.0
      %1315 = vmatpush1.msra.mxu0 0.0
      %1316 = vmatprep.subr.mxu0 0.0
      %1317 = vmatpush1.msra.mxu0 0.0
      %1318 = vmatprep.subr.mxu0 0.0
      %1319 = vmatpush1.msra.mxu0 0.0
      %1320 = vmatprep.subr.mxu0 0.0
      %1321 = vmatpush1.msra.mxu0 0.0
      %1322 = vmatprep.subr.mxu0 0.0
      %1323 = vmatpush1.msra.mxu0 0.0
      %1324 = vmatprep.subr.mxu0 0.0
      %1325 = vmatpush1.msra.mxu0 0.0
      %1326 = vmatprep.subr.mxu0 0.0
      %1327 = vmatpush1.msra.mxu0 0.0
      %1328 = vmatprep.subr.mxu0 0.0
      %1329 = vmatpush1.msra.mxu0 0.0
      %1330 = vmatprep.subr.mxu0 0.0
      %1331 = vmatpush1.msra.mxu0 0.0
      %1332 = vmatprep.subr.mxu0 0.0
      %1333 = vmatpush1.msra.mxu0 0.0
      %1334 = vmatprep.subr.mxu0 0.0
      %1335 = vmatpush1.msra.mxu0 0.0
      %1336 = vmatprep.subr.mxu0 0.0
      %1337 = vmatpush1.msra.mxu0 0.0
      %1338 = vmatprep.subr.mxu0 0.0
      %1339 = vmatpush1.msra.mxu0 0.0
      %1340 = vmatprep.subr.mxu0 0.0
      %1341 = vmatpush1.msra.mxu0 0.0
      %1342 = vmatprep.subr.mxu0 0.0
      %1343 = vmatpush1.msra.mxu0 0.0
      %1344 = vmatprep.subr.mxu0 0.0
      %1345 = vmatpush1.msra.mxu0 0.0
      %1346 = vmatprep.subr.mxu0 0.0
      %1347 = vmatpush1.msra.mxu0 0.0
      %1348 = vmatprep.subr.mxu0 0.0
      %1349 = vmatpush1.msra.mxu0 0.0
      %1350 = vmatprep.subr.mxu0 0.0
      %1351 = vmatpush1.msra.mxu0 0.0
      %1352 = vmatprep.subr.mxu0 0.0
      %1353 = vmatpush1.msra.mxu0 0.0
      %1354 = vmatprep.subr.mxu0 0.0
      %1355 = vmatpush1.msra.mxu0 0.0
      %1356 = vmatprep.subr.mxu0 0.0
      %1357 = vmatpush1.msra.mxu0 0.0
      %1358 = vmatprep.mubr.f32.mxu0 0.0
      %1359 = vmatmul.mubr.f32.gmra.mrb[0].mxu0 %v1289
      %v1360 = vpop.f32.mrb[0].mxu0
      %v1361 = vadd.f32 %v1272, %v1360
      %v1362 = vpop.f32.mrb[0].mxu0
      %1363 = vmatprep.mubr.f32.mxu0 0.0
      %1364 = vmatmul.mubr.f32.gmra.mrb[0].mxu0 %v1292
      %v1365 = vpop.f32.mrb[0].mxu0
      %v1366 = vadd.f32 %v1277, %v1365
      %v1367 = vpop.f32.mrb[0].mxu0
      %1368 = vdwg.mxu0
      %v1369 = vlaneseq
      %v1370 = vshrl.u32 %v1369, 7
      %v1371 = vsub.s32 1, %v1370
      %v1372 = vrot.slane %v430, %v1371
      %v1373 = vadd.f32 %v1361, %v1372
      %v1374 = vadd.f32 %v1366, %v1372
      %v1375 = vadd.f32 %v424, %v1373
      %v1376 = vadd.f32 %v425, %v1374
      %v1377 = vsel %vm435, %v1375, 0.0
      %1378 = vadd.xlane.f32.xlu0 %v1377
      %v1379 = vpop.xlane.xlu0 %1378
      %v1380 = vsel %vm435, %v1376, 0.0
      %1381 = vadd.xlane.f32.xlu0 %v1380
      %v1382 = vpop.xlane.xlu0 %1381
      %v1383 = vrcp.pop 32.0
      %v1384 = vmul.f32 %v1379, %v1383
      %v1385 = vmul.f32 %v1382, %v1383
      %v1386 = vsub.f32 %v1375, %v1384
      %v1387 = vsub.f32 %v1376, %v1385
      %v1388 = vmul.f32 %v1386, %v1386
      %v1389 = vmul.f32 %v1387, %v1387
      %v1390 = vsel %vm435, %v1388, 0.0
      %1391 = vadd.xlane.f32.xlu0 %v1390
      %v1392 = vpop.xlane.xlu0 %1391
      %v1393 = vsel %vm435, %v1389, 0.0
      %1394 = vadd.xlane.f32.xlu0 %v1393
      %v1395 = vpop.xlane.xlu0 %1394
      %v1396 = vmul.f32 %v1392, %v1383
      %v1397 = vmul.f32 %v1395, %v1383
      %v1398 = vadd.f32 %v1396, 1e-12
      %v1399 = vadd.f32 %v1397, 1e-12
      %v1400 = vrsqrt.pop %v1398
      %v1401 = vrsqrt.pop %v1399
      %v1402 = vmul.f32 %v1386, %v1400
      %v1403 = vmul.f32 %v1387, %v1401
      %v1404 = vlaneseq
      %v1405 = vshrl.u32 %v1404, 7
      %v1406 = vsub.s32 4, %v1405
      %v1407 = vrot.slane %v430, %v1406
      %v1408 = vmul.f32 %v1402, %v1407
      %v1409 = vmul.f32 %v1403, %v1407
      %v1410 = vlaneseq
      %v1411 = vshrl.u32 %v1410, 7
      %v1412 = vsub.s32 5, %v1411
      %v1413 = vrot.slane %v430, %v1412
      %v1414 = vadd.f32 %v1408, %v1413
      %v1415 = vadd.f32 %v1409, %v1413
      %v1416 = vld [vmem:[%s365] sm:$0xff]
      %v1417 = vld [vmem:[%s365 + $0x8] sm:$0xff]
      %v1418 = vld [vmem:[%s365 + $0x10] sm:$0xff]
      %v1419 = vld [vmem:[%s365 + $0x18] sm:$0xff]
      %v1420 = vlaneseq
      %v1421 = vshrl.u32 %v1420, 7
      %v1422 = vsub.s32 2, %v1421
      %v1423 = vrot.slane %v430, %v1422
      %v1425 = vsel %vm435, %v1414, 0
      %v1428 = vsel %vm435, %v1415, 0
      %1430 = vmatprep.subr.mxu0 0.0
      %1431 = vmatpush1.msra.mxu0 %v1416
      %1432 = vmatprep.subr.mxu0 0.0
      %1433 = vmatpush1.msra.mxu0 %v1417
      %1434 = vmatprep.subr.mxu0 0.0
      %1435 = vmatpush1.msra.mxu0 %v1418
      %1436 = vmatprep.subr.mxu0 0.0
      %1437 = vmatpush1.msra.mxu0 %v1419
      %1438 = vmatprep.subr.mxu0 0.0
      %1439 = vmatpush1.msra.mxu0 0.0
      %1440 = vmatprep.subr.mxu0 0.0
      %1441 = vmatpush1.msra.mxu0 0.0
      %1442 = vmatprep.subr.mxu0 0.0
      %1443 = vmatpush1.msra.mxu0 0.0
      %1444 = vmatprep.subr.mxu0 0.0
      %1445 = vmatpush1.msra.mxu0 0.0
      %1446 = vmatprep.subr.mxu0 0.0
      %1447 = vmatpush1.msra.mxu0 0.0
      %1448 = vmatprep.subr.mxu0 0.0
      %1449 = vmatpush1.msra.mxu0 0.0
      %1450 = vmatprep.subr.mxu0 0.0
      %1451 = vmatpush1.msra.mxu0 0.0
      %1452 = vmatprep.subr.mxu0 0.0
      %1453 = vmatpush1.msra.mxu0 0.0
      %1454 = vmatprep.subr.mxu0 0.0
      %1455 = vmatpush1.msra.mxu0 0.0
      %1456 = vmatprep.subr.mxu0 0.0
      %1457 = vmatpush1.msra.mxu0 0.0
      %1458 = vmatprep.subr.mxu0 0.0
      %1459 = vmatpush1.msra.mxu0 0.0
      %1460 = vmatprep.subr.mxu0 0.0
      %1461 = vmatpush1.msra.mxu0 0.0
      %1462 = vmatprep.subr.mxu0 0.0
      %1463 = vmatpush1.msra.mxu0 0.0
      %1464 = vmatprep.subr.mxu0 0.0
      %1465 = vmatpush1.msra.mxu0 0.0
      %1466 = vmatprep.subr.mxu0 0.0
      %1467 = vmatpush1.msra.mxu0 0.0
      %1468 = vmatprep.subr.mxu0 0.0
      %1469 = vmatpush1.msra.mxu0 0.0
      %1470 = vmatprep.subr.mxu0 0.0
      %1471 = vmatpush1.msra.mxu0 0.0
      %1472 = vmatprep.subr.mxu0 0.0
      %1473 = vmatpush1.msra.mxu0 0.0
      %1474 = vmatprep.subr.mxu0 0.0
      %1475 = vmatpush1.msra.mxu0 0.0
      %1476 = vmatprep.subr.mxu0 0.0
      %1477 = vmatpush1.msra.mxu0 0.0
      %1478 = vmatprep.subr.mxu0 0.0
      %1479 = vmatpush1.msra.mxu0 0.0
      %1480 = vmatprep.subr.mxu0 0.0
      %1481 = vmatpush1.msra.mxu0 0.0
      %1482 = vmatprep.subr.mxu0 0.0
      %1483 = vmatpush1.msra.mxu0 0.0
      %1484 = vmatprep.subr.mxu0 0.0
      %1485 = vmatpush1.msra.mxu0 0.0
      %1486 = vmatprep.subr.mxu0 0.0
      %1487 = vmatpush1.msra.mxu0 0.0
      %1488 = vmatprep.subr.mxu0 0.0
      %1489 = vmatpush1.msra.mxu0 0.0
      %1490 = vmatprep.subr.mxu0 0.0
      %1491 = vmatpush1.msra.mxu0 0.0
      %1492 = vmatprep.subr.mxu0 0.0
      %1493 = vmatpush1.msra.mxu0 0.0
      %1494 = vmatprep.mubr.f32.mxu0 0.0
      %1495 = vmatmul.mubr.f32.gmra.mrb[0].mxu0 %v1425
      %v1496 = vpop.f32.mrb[0].mxu0
      %v1497 = vadd.f32 %v1423, %v1496
      %v1498 = vpop.f32.mrb[0].mxu0
      %1499 = vmatprep.mubr.f32.mxu0 0.0
      %1500 = vmatmul.mubr.f32.gmra.mrb[0].mxu0 %v1428
      %v1501 = vpop.f32.mrb[0].mxu0
      %v1502 = vadd.f32 %v1423, %v1501
      %v1503 = vpop.f32.mrb[0].mxu0
      %1504 = vdwg.mxu0
      %v1505 = vmul.f32 %v1497, 0.5
      %v1506 = vmul.f32 %v1502, 0.5
      %v1507 = vmul.f32 %v1497, 0.044715
      %v1508 = vmul.f32 %v1502, 0.044715
      %v1509 = vmul.f32 %v1507, %v1497
      %v1510 = vmul.f32 %v1508, %v1502
      %v1511 = vmul.f32 %v1509, %v1497
      %v1512 = vmul.f32 %v1510, %v1502
      %v1513 = vadd.f32 %v1497, %v1511
      %v1514 = vadd.f32 %v1502, %v1512
      %v1515 = vmul.f32 %v1513, 0.7978846
      %v1516 = vmul.f32 %v1514, 0.7978846
      %v1517 = vtanh.pop %v1515
      %v1518 = vtanh.pop %v1516
      %v1519 = vadd.f32 %v1517, 1.0
      %v1520 = vadd.f32 %v1518, 1.0
      %v1521 = vmul.f32 %v1505, %v1519
      %v1522 = vmul.f32 %v1506, %v1520
      %v1523 = vld [vmem:[%s370] sm:$0xff]
      %v1524 = vld [vmem:[%s370 + $0x8] sm:$0xff]
      %v1525 = vld [vmem:[%s370 + $0x10] sm:$0xff]
      %v1526 = vld [vmem:[%s370 + $0x18] sm:$0xff]
      %v1527 = vld [vmem:[%s370 + $0x20] sm:$0xff]
      %v1528 = vld [vmem:[%s370 + $0x28] sm:$0xff]
      %v1529 = vld [vmem:[%s370 + $0x30] sm:$0xff]
      %v1530 = vld [vmem:[%s370 + $0x38] sm:$0xff]
      %v1531 = vld [vmem:[%s370 + $0x40] sm:$0xff]
      %v1532 = vld [vmem:[%s370 + $0x48] sm:$0xff]
      %v1533 = vld [vmem:[%s370 + $0x50] sm:$0xff]
      %v1534 = vld [vmem:[%s370 + $0x58] sm:$0xff]
      %v1535 = vld [vmem:[%s370 + $0x60] sm:$0xff]
      %v1536 = vld [vmem:[%s370 + $0x68] sm:$0xff]
      %v1537 = vld [vmem:[%s370 + $0x70] sm:$0xff]
      %v1538 = vld [vmem:[%s370 + $0x78] sm:$0xff]
      %v1539 = vlaneseq
      %v1540 = vshrl.u32 %v1539, 7
      %v1541 = vsub.s32 3, %v1540
      %v1542 = vrot.slane %v430, %v1541
      %1543 = vmatprep.subr.mxu0 0.0
      %1544 = vmatpush1.msra.mxu0 %v1523
      %1545 = vmatprep.subr.mxu0 0.0
      %1546 = vmatpush1.msra.mxu0 %v1524
      %1547 = vmatprep.subr.mxu0 0.0
      %1548 = vmatpush1.msra.mxu0 %v1525
      %1549 = vmatprep.subr.mxu0 0.0
      %1550 = vmatpush1.msra.mxu0 %v1526
      %1551 = vmatprep.subr.mxu0 0.0
      %1552 = vmatpush1.msra.mxu0 %v1527
      %1553 = vmatprep.subr.mxu0 0.0
      %1554 = vmatpush1.msra.mxu0 %v1528
      %1555 = vmatprep.subr.mxu0 0.0
      %1556 = vmatpush1.msra.mxu0 %v1529
      %1557 = vmatprep.subr.mxu0 0.0
      %1558 = vmatpush1.msra.mxu0 %v1530
      %1559 = vmatprep.subr.mxu0 0.0
      %1560 = vmatpush1.msra.mxu0 %v1531
      %1561 = vmatprep.subr.mxu0 0.0
      %1562 = vmatpush1.msra.mxu0 %v1532
      %1563 = vmatprep.subr.mxu0 0.0
      %1564 = vmatpush1.msra.mxu0 %v1533
      %1565 = vmatprep.subr.mxu0 0.0
      %1566 = vmatpush1.msra.mxu0 %v1534
      %1567 = vmatprep.subr.mxu0 0.0
      %1568 = vmatpush1.msra.mxu0 %v1535
      %1569 = vmatprep.subr.mxu0 0.0
      %1570 = vmatpush1.msra.mxu0 %v1536
      %1571 = vmatprep.subr.mxu0 0.0
      %1572 = vmatpush1.msra.mxu0 %v1537
      %1573 = vmatprep.subr.mxu0 0.0
      %1574 = vmatpush1.msra.mxu0 %v1538
      %1575 = vmatprep.subr.mxu0 0.0
      %1576 = vmatpush1.msra.mxu0 0.0
      %1577 = vmatprep.subr.mxu0 0.0
      %1578 = vmatpush1.msra.mxu0 0.0
      %1579 = vmatprep.subr.mxu0 0.0
      %1580 = vmatpush1.msra.mxu0 0.0
      %1581 = vmatprep.subr.mxu0 0.0
      %1582 = vmatpush1.msra.mxu0 0.0
      %1583 = vmatprep.subr.mxu0 0.0
      %1584 = vmatpush1.msra.mxu0 0.0
      %1585 = vmatprep.subr.mxu0 0.0
      %1586 = vmatpush1.msra.mxu0 0.0
      %1587 = vmatprep.subr.mxu0 0.0
      %1588 = vmatpush1.msra.mxu0 0.0
      %1589 = vmatprep.subr.mxu0 0.0
      %1590 = vmatpush1.msra.mxu0 0.0
      %1591 = vmatprep.subr.mxu0 0.0
      %1592 = vmatpush1.msra.mxu0 0.0
      %1593 = vmatprep.subr.mxu0 0.0
      %1594 = vmatpush1.msra.mxu0 0.0
      %1595 = vmatprep.subr.mxu0 0.0
      %1596 = vmatpush1.msra.mxu0 0.0
      %1597 = vmatprep.subr.mxu0 0.0
      %1598 = vmatpush1.msra.mxu0 0.0
      %1599 = vmatprep.subr.mxu0 0.0
      %1600 = vmatpush1.msra.mxu0 0.0
      %1601 = vmatprep.subr.mxu0 0.0
      %1602 = vmatpush1.msra.mxu0 0.0
      %1603 = vmatprep.subr.mxu0 0.0
      %1604 = vmatpush1.msra.mxu0 0.0
      %1605 = vmatprep.subr.mxu0 0.0
      %1606 = vmatpush1.msra.mxu0 0.0
      %1607 = vmatprep.mubr.f32.mxu0 0.0
      %1608 = vmatmul.mubr.f32.gmra.mrb[0].mxu0 %v1521
      %v1609 = vpop.f32.mrb[0].mxu0
      %v1610 = vadd.f32 %v1542, %v1609
      %v1611 = vpop.f32.mrb[0].mxu0
      %1612 = vmatprep.mubr.f32.mxu0 0.0
      %1613 = vmatmul.mubr.f32.gmra.mrb[0].mxu0 %v1522
      %v1614 = vpop.f32.mrb[0].mxu0
      %v1615 = vadd.f32 %v1542, %v1614
      %v1616 = vpop.f32.mrb[0].mxu0
      %1617 = vdwg.mxu0
      %v1618 = vadd.f32 %v1414, %v1610
      %v1619 = vadd.f32 %v1415, %v1615
      %v1620 = vsel %vm435, %v1618, 0.0
      %1621 = vadd.xlane.f32.xlu0 %v1620
      %v1622 = vpop.xlane.xlu0 %1621
      %v1623 = vsel %vm435, %v1619, 0.0
      %1624 = vadd.xlane.f32.xlu0 %v1623
      %v1625 = vpop.xlane.xlu0 %1624
      %v1626 = vmul.f32 %v1622, %v1383
      %v1627 = vmul.f32 %v1625, %v1383
      %v1628 = vsub.f32 %v1618, %v1626
      %v1629 = vsub.f32 %v1619, %v1627
      %v1630 = vmul.f32 %v1628, %v1628
      %v1631 = vmul.f32 %v1629, %v1629
      %v1632 = vsel %vm435, %v1630, 0.0
      %1633 = vadd.xlane.f32.xlu0 %v1632
      %v1634 = vpop.xlane.xlu0 %1633
      %v1635 = vsel %vm435, %v1631, 0.0
      %1636 = vadd.xlane.f32.xlu0 %v1635
      %v1637 = vpop.xlane.xlu0 %1636
      %v1638 = vmul.f32 %v1634, %v1383
      %v1639 = vmul.f32 %v1637, %v1383
      %v1640 = vadd.f32 %v1638, 1e-12
      %v1641 = vadd.f32 %v1639, 1e-12
      %v1642 = vrsqrt.pop %v1640
      %v1643 = vrsqrt.pop %v1641
      %v1644 = vmul.f32 %v1628, %v1642
      %v1645 = vmul.f32 %v1629, %v1643
      %v1646 = vlaneseq
      %v1647 = vshrl.u32 %v1646, 7
      %v1648 = vsub.s32 6, %v1647
      %v1649 = vrot.slane %v430, %v1648
      %v1650 = vmul.f32 %v1644, %v1649
      %v1651 = vmul.f32 %v1645, %v1649
      %v1652 = vlaneseq
      %v1653 = vshrl.u32 %v1652, 7
      %v1654 = vsub.s32 7, %v1653
      %v1655 = vrot.slane %v430, %v1654
      %v1656 = vadd.f32 %v1650, %v1655
      %v1657 = vadd.f32 %v1651, %v1655
      %1658 = vst.msk [vmem:[#allocation2] sm:$0xff] %vm435, %v1656
      %1659 = vst.msk [vmem:[#allocation2 + $0x8] sm:$0xff] %vm435, %v1657
      %p1660 = scmp.eq.s32.totalorder %s20, 1
      // Predicated region
      $region61: #{multitask_forward.1} parent=55 // pred_check
        %p1661 = pneg %p1660
      $region62: #{multitask_forward.1} parent=55 // pred_check_branch
        %1663 = sbr.rel (%p1661) target = $region64
      $region63: #{multitask_forward.1} parent=55 // pred_region
        %v1664 = vld [vmem:[%s7] sm:$0xff]
        %v1665 = vld [vmem:[%s7 + $0x8] sm:$0xff]
        %v1666 = vld [vmem:[%s7 + $0x10] sm:$0xff]
        %v1667 = vld [vmem:[%s7 + $0x18] sm:$0xff]
        %v1668 = vld [vmem:[%s8] sm:$0x1]
        %v1670 = vlaneseq
        %v1671 = vshrl.u32 %v1670, 7
        %v1672 = vsub.s32 0, %v1671
        %v1673 = vrot.slane %v1668, %v1672
        %v1676 = vsel %vm435, %v1656, 0
        %v1679 = vsel %vm435, %v1657, 0
        %1681 = vmatprep.subr.mxu0 0.0
        %1682 = vmatpush1.msra.mxu0 %v1664
        %1683 = vmatprep.subr.mxu0 0.0
        %1684 = vmatpush1.msra.mxu0 %v1665
        %1685 = vmatprep.subr.mxu0 0.0
        %1686 = vmatpush1.msra.mxu0 %v1666
        %1687 = vmatprep.subr.mxu0 0.0
        %1688 = vmatpush1.msra.mxu0 %v1667
        %1689 = vmatprep.subr.mxu0 0.0
        %1690 = vmatpush1.msra.mxu0 0.0
        %1691 = vmatprep.subr.mxu0 0.0
        %1692 = vmatpush1.msra.mxu0 0.0
        %1693 = vmatprep.subr.mxu0 0.0
        %1694 = vmatpush1.msra.mxu0 0.0
        %1695 = vmatprep.subr.mxu0 0.0
        %1696 = vmatpush1.msra.mxu0 0.0
        %1697 = vmatprep.subr.mxu0 0.0
        %1698 = vmatpush1.msra.mxu0 0.0
        %1699 = vmatprep.subr.mxu0 0.0
        %1700 = vmatpush1.msra.mxu0 0.0
        %1701 = vmatprep.subr.mxu0 0.0
        %1702 = vmatpush1.msra.mxu0 0.0
        %1703 = vmatprep.subr.mxu0 0.0
        %1704 = vmatpush1.msra.mxu0 0.0
        %1705 = vmatprep.subr.mxu0 0.0
        %1706 = vmatpush1.msra.mxu0 0.0
        %1707 = vmatprep.subr.mxu0 0.0
        %1708 = vmatpush1.msra.mxu0 0.0
        %1709 = vmatprep.subr.mxu0 0.0
        %1710 = vmatpush1.msra.mxu0 0.0
        %1711 = vmatprep.subr.mxu0 0.0
        %1712 = vmatpush1.msra.mxu0 0.0
        %1713 = vmatprep.subr.mxu0 0.0
        %1714 = vmatpush1.msra.mxu0 0.0
        %1715 = vmatprep.subr.mxu0 0.0
        %1716 = vmatpush1.msra.mxu0 0.0
        %1717 = vmatprep.subr.mxu0 0.0
        %1718 = vmatpush1.msra.mxu0 0.0
        %1719 = vmatprep.subr.mxu0 0.0
        %1720 = vmatpush1.msra.mxu0 0.0
        %1721 = vmatprep.subr.mxu0 0.0
        %1722 = vmatpush1.msra.mxu0 0.0
        %1723 = vmatprep.subr.mxu0 0.0
        %1724 = vmatpush1.msra.mxu0 0.0
        %1725 = vmatprep.subr.mxu0 0.0
        %1726 = vmatpush1.msra.mxu0 0.0
        %1727 = vmatprep.subr.mxu0 0.0
        %1728 = vmatpush1.msra.mxu0 0.0
        %1729 = vmatprep.subr.mxu0 0.0
        %1730 = vmatpush1.msra.mxu0 0.0
        %1731 = vmatprep.subr.mxu0 0.0
        %1732 = vmatpush1.msra.mxu0 0.0
        %1733 = vmatprep.subr.mxu0 0.0
        %1734 = vmatpush1.msra.mxu0 0.0
        %1735 = vmatprep.subr.mxu0 0.0
        %1736 = vmatpush1.msra.mxu0 0.0
        %1737 = vmatprep.subr.mxu0 0.0
        %1738 = vmatpush1.msra.mxu0 0.0
        %1739 = vmatprep.subr.mxu0 0.0
        %1740 = vmatpush1.msra.mxu0 0.0
        %1741 = vmatprep.subr.mxu0 0.0
        %1742 = vmatpush1.msra.mxu0 0.0
        %1743 = vmatprep.subr.mxu0 0.0
        %1744 = vmatpush1.msra.mxu0 0.0
        %1745 = vmatprep.mubr.f32.mxu0 0.0
        %1746 = vmatmul.mubr.f32.gmra.mrb[0].mxu0 %v1676
        %v1747 = vpop.f32.mrb[0].mxu0
        %v1748 = vadd.f32 %v1673, %v1747
        %v1749 = vpop.f32.mrb[0].mxu0
        %1750 = vmatprep.mubr.f32.mxu0 0.0
        %1751 = vmatmul.mubr.f32.gmra.mrb[0].mxu0 %v1679
        %v1752 = vpop.f32.mrb[0].mxu0
        %v1753 = vadd.f32 %v1673, %v1752
        %v1754 = vpop.f32.mrb[0].mxu0
        %1755 = vdwg.mxu0
        %1756 = vst [vmem:[%s9] sm:$0xff] %v1748
        %1757 = vst [vmem:[%s9 + $0x8] sm:$0xff] %v1753
      $region64: #{multitask_forward.1} parent=55 // pred_fallthru
        _
      // Predicated region
      $region65: #{multitask_forward.1} parent=55 // pred_check
        %p1758 = pneg %p242
      $region66: #{multitask_forward.1} parent=55 // pred_check_branch
        %1760 = sbr.rel (%p1758) target = $region68
      $region67: #{multitask_forward.1} parent=55 // pred_region
        _
      $region68: #{multitask_forward.1} parent=55 // pred_fallthru
        _
      // Predicated region
      $region69: #{multitask_forward.1} parent=55 // pred_check
        %p1761 = pneg %p242
      $region70: #{multitask_forward.1} parent=55 // pred_check_branch
        %1763 = sbr.rel (%p1761) target = $region72
      $region71: #{multitask_forward.1} parent=55 // pred_region
        _
      $region72: #{multitask_forward.1} parent=55 // pred_fallthru
        _
    $region56: #{multitask_forward.1} parent=5 // pred_fallthru
      _
    %p1764 = scmp.le.s32.totalorder 2, %s15
    // Predicated region
    $region73: #{multitask_forward.1} parent=5 // pred_check
      %p1765 = pneg %p1764
    $region74: #{multitask_forward.1} parent=5 // pred_check_branch
      %1767 = sbr.rel (%p1765) target = $region76
    $region75: #{multitask_forward.1} parent=5 // pred_region
      %s1768 = ssub.s32 %s15, 2
    $region76: #{multitask_forward.1} parent=5 // pred_fallthru
      _
  $region6: #{multitask_forward.1} parent=0 // loop_footer
    %s19 = sadd.s32 1, %s15
  $region7: #{multitask_forward.1} parent=0 // loop_footer_branch
    %14 = sbr.rel target = $region3
  $region8: #{multitask_forward.1} parent=0 // loop_exit
    _

</llo_original>
